<compile_context>
chip_gen: v6e
topology: v6e:2x2x1
jax: 0.10.0
libtpu: 0.0.40
codegen_flags: <defaults>
</compile_context>

<pallas_src>
import jax
import jax.numpy as jnp
from jax.experimental import pallas as pl
from jax.experimental.pallas import tpu as pltpu


def _round_up(v, m):
    return (v + m - 1) // m * m


def _cdiv(a, b):
    return (a + b - 1) // b


def _vmem_budget_bytes():
    """~75% of physical VMEM; fall back to the v7x 64 MiB floor if unknown."""
    cap = 64 << 20
    try:
        info = pltpu.get_tpu_info()
        cap = int(getattr(info, "vmem_capacity_bytes", cap) or cap)
    except Exception:
        pass
    return int(cap * 3 // 4)


def _slab(np8, tn_target):
    """Split np8 rows into equal slabs of ~tn_target rows (multiples of 8)."""
    num_slabs = _cdiv(np8, tn_target)
    tn = _round_up(_cdiv(np8, num_slabs), 8)
    return tn, num_slabs, num_slabs * tn          # (Tn, num_slabs, padded N)


def _vmem_estimate(bt, npad, dp, tn, num_bufs, L, itemsize):
    adj_buf = num_bufs * bt * tn * npad * 4       # manual adj slab buffers
    acts = 2 * bt * npad * dp * 4                 # ping-pong activations
    x_in = 2 * bt * npad * dp * itemsize          # auto double-buffered input
    w = L * dp * dp * itemsize                    # single-buffered weight stack
    out = 2 * bt * L * dp * itemsize              # auto double-buffered output
    tmp = 2 * bt * tn * dp * 4                    # ax / y slab temporaries
    return adj_buf + acts + x_in + w + out + tmp + (2 << 20)   # +2 MiB slack


def _select_tiling(B, N, dp, L, itemsize, budget):
    """Pick (Bt, Np, Tn, num_slabs, num_bufs, resident) under the VMEM budget."""
    np8 = _round_up(max(N, 8), 8)
    # >= 2 grid steps whenever B >= 2 so both v7x TensorCores get work.
    bt_cap = max(1, (B + 1) // 2)
    tn0, ns0, npad0 = _slab(np8, 512)             # Tn ~ 512 -> large MXU M dim

    # 1) Prefer full adjacency residency (adj read from HBM once per tile)
    #    with the largest batch tile that fits.
    for bt in range(bt_cap, 0, -1):
        if _vmem_estimate(bt, npad0, dp, tn0, ns0, L, itemsize) <= budget:
            return bt, npad0, tn0, ns0, ns0, True
    # 2) Otherwise stream adj row slabs with 2 buffers (re-fetched per layer).
    for bt in range(bt_cap, 0, -1):
        for tn_target in (512, 256, 128, 64, 32, 16, 8):
            if tn_target >= np8:
                continue
            tn, ns, npad = _slab(np8, tn_target)
            if _vmem_estimate(bt, npad, dp, tn, 2, L, itemsize) <= budget:
                return bt, npad, tn, ns, 2, False
    # TODO(synk): feature-dim (Dp) tiling for extreme N*Dp activations.
    raise ValueError("GCN activations do not fit the VMEM budget; "
                     "feature-dim tiling is not implemented.")


def _make_gcn_kernel(L, Bt, Np, Dp, Tn, num_slabs, resident):
    """Kernel closure for one (Bt, Np, Dp, Tn) configuration."""

    def kernel(adj_hbm, x_ref, w_ref, out_ref, act_a, act_b, adj_buf, sem):
        # adj_hbm : (Bp, Np, Np) f32, HBM (manual DMA)
        # x_ref   : (Bt, Np, Dp)      padded layer-0 input (auto pipelined)
        # w_ref   : (L, Dp, Dp)       zero-padded stacked weights
        # out_ref : (Bt, L, Dp)       per-layer node-max
        # act_a/b : (Bt, Np, Dp) f32  activation ping-pong (VMEM resident)
        # adj_buf : (num_bufs, Bt, Tn, Np) f32 adjacency row slabs
        # sem     : DMA semaphores, one per slab buffer
        b0 = pl.multiple_of(pl.program_id(0) * Bt, Bt)

        def copy(slab, slot):
            return pltpu.make_async_copy(
                adj_hbm.at[pl.ds(b0, Bt), pl.ds(slab * Tn, Tn), pl.ds(0, Np)],
                adj_buf.at[slot],
                sem.at[slot])

        # Kick off the adjacency DMAs for this batch tile.
        if resident:
            for r in range(num_slabs):   # whole adj -> VMEM once, reused by all layers
                copy(r, r).start()
        else:
            copy(0, 0).start()           # double-buffered streaming

        acts = (act_a, act_b)
        for l in range(L):               # static unroll over layers
            x_in = x_ref if l == 0 else acts[(l - 1) % 2]
            x_out = acts[l % 2]
            x_full = x_in[...].astype(jnp.float32)            # (Bt, Np, Dp)
            w_l = w_ref[l]                                     # (Dp, Dp)
            pool = None
            for r in range(num_slabs):   # static unroll over adjacency row slabs
                step = l * num_slabs + r
                if resident:
                    slot = r
                    if l == 0:
                        copy(r, slot).wait()
                else:
                    slot = step % 2
                    copy(r, slot).wait()
                    nxt = step + 1
                    if nxt < L * num_slabs:    # prefetch next slab (wraps to next layer)
                        copy(nxt % num_slabs, nxt % 2).start()
                a_slab = adj_buf[slot]                          # (Bt, Tn, Np)
                # adj @ x (row slab) — same association as the PyTorch module.
                ax = jnp.einsum("bij,bjd->bid", a_slab, x_full,
                                preferred_element_type=jnp.float32)   # (Bt, Tn, Dp)
                # (adj @ x) @ W_l : flatten batch*rows into one tall MXU matmul.
                y = jnp.dot(ax.reshape(Bt * Tn, Dp), w_l,
                            preferred_element_type=jnp.float32)
                y = jnp.maximum(y, 0.0).reshape(Bt, Tn, Dp)     # ReLU
                if l < L - 1:                                   # last layer only pools
                    x_out[:, pl.ds(r * Tn, Tn), :] = y
                m = jnp.max(y, axis=1)                          # (Bt, Dp) node max
                pool = m if pool is None else jnp.maximum(pool, m)
            out_ref[:, l, :] = pool.astype(out_ref.dtype)       # torch.max(dim=1).values

    return kernel


def gcn_encoder_graph(x, adj, weights):
    """Mirrors GCN_encoder_graph.forward.  `weights` = [W_first, *W_blocks, W_last]."""
    B, N, Din = x.shape
    L = len(weights)
    d_outs = [int(w.shape[1]) for w in weights]
    # torch.cat(dim=1) in the original requires equal per-layer output dims.
    assert len(set(d_outs)) == 1, "hidden_dim must equal output_dim (torch.cat dim=1)"
    D = d_outs[0]

    compute_dtype = jnp.float32
    itemsize = 4
    Dp = _round_up(max([Din] + d_outs), 128)       # lane-dense feature width

    budget = _vmem_budget_bytes()
    Bt, Np, Tn, num_slabs, num_bufs, resident = _select_tiling(
        B, N, Dp, L, itemsize, budget)
    Bp = _round_up(B, Bt)

    # Zero padding is exact: ReLU keeps activations >= 0, so padded rows /
    # columns / graphs cannot change the per-node max, and are sliced off.
    adj_p = jnp.zeros((Bp, Np, Np), compute_dtype).at[:B, :N, :N].set(
        adj.astype(compute_dtype))
    x_p = jnp.zeros((Bp, Np, Dp), compute_dtype).at[:B, :N, :Din].set(
        x.astype(compute_dtype))
    w_stack = jnp.zeros((L, Dp, Dp), compute_dtype)
    d_in = Din
    for l, w in enumerate(weights):
        w_stack = w_stack.at[l, :d_in, :int(w.shape[1])].set(w.astype(compute_dtype))
        d_in = int(w.shape[1])

    kernel = _make_gcn_kernel(L, Bt, Np, Dp, Tn, num_slabs, resident)

    # Advisory cost estimate using the padded shapes the kernel really executes.
    adj_reads = 1 if resident else L
    flops = 2 * L * Bp * (Np * Np * Dp + Np * Dp * Dp)
    bytes_accessed = itemsize * (adj_reads * Bp * Np * Np + Bp * Np * Dp
                                 + L * Dp * Dp + Bp * L * Dp)

    def build_call(single_buffered_weights):
        w_kwargs = {}
        if single_buffered_weights:
            # Constant index_map -> no point double-buffering the weight stack.
            w_kwargs["pipeline_mode"] = pl.Buffered(1)
        return pl.pallas_call(
            kernel,
            out_shape=jax.ShapeDtypeStruct((Bp, L, Dp), x.dtype),
            grid=(Bp // Bt,),
            in_specs=[
                pl.BlockSpec(memory_space=pl.ANY),                  # adj stays in HBM
                pl.BlockSpec((Bt, Np, Dp), lambda b: (b, 0, 0)),    # x (layer-0 input)
                pl.BlockSpec((L, Dp, Dp), lambda b: (0, 0, 0),
                             **w_kwargs),                           # all layer weights
            ],
            out_specs=pl.BlockSpec((Bt, L, Dp), lambda b: (b, 0, 0)),
            scratch_shapes=[
                pltpu.VMEM((Bt, Np, Dp), jnp.float32),              # activations (ping)
                pltpu.VMEM((Bt, Np, Dp), jnp.float32),              # activations (pong)
                pltpu.VMEM((num_bufs, Bt, Tn, Np), jnp.float32),    # adj row slabs
                pltpu.SemaphoreType.DMA((num_bufs,)),
            ],
            compiler_params=pltpu.CompilerParams(
                dimension_semantics=("parallel",),
                vmem_limit_bytes=budget),
            cost_estimate=pl.CostEstimate(flops=flops, transcendentals=0,
                                          bytes_accessed=bytes_accessed),
        )

    try:
        pooled = jax.jit(build_call(True))(adj_p, x_p, w_stack)
    except Exception:
        # pl.Buffered(1) unsupported on this jax version: fall back to the
        # default double-buffered weight stack.
        pooled = jax.jit(build_call(False))(adj_p, x_p, w_stack)

    out = pooled[:B, :, :D]                   # drop batch / feature padding
    return jnp.transpose(out, (1, 0, 2))      # (num_layers, B, D) == permute(1,0,2)


def xavier_uniform_relu(key, shape, dtype=jnp.float32):
    # nn.init.xavier_uniform with gain = calculate_gain('relu') = sqrt(2)
    fan_in, fan_out = shape
    gain = 2.0 ** 0.5
    bound = gain * (6.0 / (fan_in + fan_out)) ** 0.5
    return jax.random.uniform(key, shape, dtype, minval=-bound, maxval=bound)


def init_params(key, input_dim, hidden_dim, output_dim, num_layers):
    # L = num_layers convs actually applied: first + (num_layers-2) blocks + last.
    keys = jax.random.split(key, num_layers)
    w_first = xavier_uniform_relu(keys[0], (input_dim, hidden_dim))
    w_blocks = [xavier_uniform_relu(keys[1 + i], (hidden_dim, hidden_dim))
                for i in range(num_layers - 2)]
    w_last = xavier_uniform_relu(keys[num_layers - 1], (hidden_dim, output_dim))
    return [w_first] + w_blocks + [w_last]


def gcn_reference(x, adj, weights):
    """Pure-JAX reference with identical semantics (correctness check)."""
    outs = []
    for w in weights:
        x = jnp.maximum(jnp.einsum("bij,bjf->bif", adj, x) @ w, 0.0)
        outs.append(jnp.max(x, axis=1, keepdims=True))
    return jnp.transpose(jnp.concatenate(outs, axis=1), (1, 0, 2))


if __name__ == "__main__":
    # Small deterministic example (hidden_dim == output_dim is required by the
    # torch.cat(dim=1) in the original module).
    B, N = 2, 16
    input_dim, hidden_dim, output_dim, num_layers = 8, 32, 32, 3

    key = jax.random.PRNGKey(0)
    kx, kadj, kparam = jax.random.split(key, 3)

    x = jax.random.normal(kx, (B, N, input_dim), dtype=jnp.float32)
    a = jax.random.uniform(kadj, (B, N, N), dtype=jnp.float32)
    adj = 0.5 * (a + jnp.transpose(a, (0, 2, 1)))   # symmetric, non-negative

    weights = init_params(kparam, input_dim, hidden_dim, output_dim, num_layers)

    out = gcn_encoder_graph(x, adj, weights)
    out = jax.block_until_ready(out)
    assert out.shape == (num_layers, B, output_dim), out.shape

    ref = gcn_reference(x, adj, weights)
    max_err = float(jnp.max(jnp.abs(out - ref)))
    assert jnp.allclose(out, ref, atol=1e-4, rtol=1e-4), max_err

    print("KERNEL_OK")
</pallas_src>

<mosaic_0001>
module attributes {stable_mosaic.version = 11 : i64} {
  func.func @kernel(%arg0: i32, %arg1: memref<2x16x16xf32, #tpu.memory_space<any>>, %arg2: memref<1x16x128xf32, #tpu.memory_space<vmem>>, %arg3: memref<3x128x128xf32, #tpu.memory_space<vmem>>, %arg4: memref<1x3x128xf32, #tpu.memory_space<vmem>>, %arg5: memref<1x16x128xf32, #tpu.memory_space<vmem>>, %arg6: memref<1x16x128xf32, #tpu.memory_space<vmem>>, %arg7: memref<1x1x16x16xf32, #tpu.memory_space<vmem>>, %arg8: memref<1x!tpu.dma_semaphore, #tpu.memory_space<semaphore_mem>>) attributes {dimension_semantics = [#tpu.dimension_semantics<parallel>], iteration_bounds = array<i64: 2>, scalar_prefetch = 0 : i64, scratch_operands = 4 : i64, tpu.core_type = #tpu.core_type<tc>, window_params = [{}, {transform_indices = @transform_1, window_bounds = array<i64: 1, 16, 128>}, {pipeline_mode = #tpu.pipeline_mode<synchronous>, transform_indices = @transform_2, window_bounds = array<i64: 3, 128, 128>}, {transform_indices = @transform_3, window_bounds = array<i64: 1, 3, 128>}]} {
    %c1_i32 = arith.constant 1 : i32
    %0 = arith.muli %arg0, %c1_i32 : i32
    %1 = tpu.assume_multiple %0, 1 : i32
    %c0_i32 = arith.constant 0 : i32
    %c0_i32_0 = arith.constant 0 : i32
    %c0_i32_1 = arith.constant 0 : i32
    %c0_i32_2 = arith.constant 0 : i32
    %2 = tpu.memref_slice %arg1[%1, %c0_i32_1, %c0_i32_2] : memref<2x16x16xf32, #tpu.memory_space<any>> -> memref<1x16x16xf32, #tpu.memory_space<any>>
    %c0_i32_3 = arith.constant 0 : i32
    %c0_i32_4 = arith.constant 0 : i32
    %c0_i32_5 = arith.constant 0 : i32
    %3 = tpu.memref_slice %arg7[%c0_i32, %c0_i32_3, %c0_i32_4, %c0_i32_5] : memref<1x1x16x16xf32, #tpu.memory_space<vmem>> -> memref<1x1x16x16xf32, #tpu.memory_space<vmem>>
    %4 = tpu.memref_squeeze %3 : memref<1x1x16x16xf32, #tpu.memory_space<vmem>> -> memref<1x16x16xf32, #tpu.memory_space<vmem>>
    %5 = tpu.memref_slice %arg8[%c0_i32_0] : memref<1x!tpu.dma_semaphore, #tpu.memory_space<semaphore_mem>> -> memref<1x!tpu.dma_semaphore, #tpu.memory_space<semaphore_mem>>
    %6 = tpu.memref_squeeze %5 : memref<1x!tpu.dma_semaphore, #tpu.memory_space<semaphore_mem>> -> memref<!tpu.dma_semaphore, #tpu.memory_space<semaphore_mem>>
    tpu.enqueue_dma source(%2 : memref<1x16x16xf32, #tpu.memory_space<any>>) target(%4 : memref<1x16x16xf32, #tpu.memory_space<vmem>>) target_semaphore(%6 : memref<!tpu.dma_semaphore, #tpu.memory_space<semaphore_mem>>)
    %c0 = arith.constant 0 : index
    %c0_6 = arith.constant 0 : index
    %c0_7 = arith.constant 0 : index
    %7 = vector.load %arg2[%c0, %c0_6, %c0_7] : memref<1x16x128xf32, #tpu.memory_space<vmem>>, vector<1x16x128xf32>
    %c0_8 = arith.constant 0 : index
    %c0_9 = arith.constant 0 : index
    %c0_10 = arith.constant 0 : index
    %8 = vector.load %arg3[%c0_8, %c0_9, %c0_10] : memref<3x128x128xf32, #tpu.memory_space<vmem>>, vector<1x128x128xf32>
    %9 = vector.shape_cast %8 : vector<1x128x128xf32> to vector<128x128xf32>
    %c0_i32_11 = arith.constant 0 : i32
    %c0_i32_12 = arith.constant 0 : i32
    %c0_i32_13 = arith.constant 0 : i32
    %c0_i32_14 = arith.constant 0 : i32
    %10 = tpu.memref_slice %arg1[%1, %c0_i32_13, %c0_i32_14] : memref<2x16x16xf32, #tpu.memory_space<any>> -> memref<1x16x16xf32, #tpu.memory_space<any>>
    %c0_i32_15 = arith.constant 0 : i32
    %c0_i32_16 = arith.constant 0 : i32
    %c0_i32_17 = arith.constant 0 : i32
    %11 = tpu.memref_slice %arg7[%c0_i32_11, %c0_i32_15, %c0_i32_16, %c0_i32_17] : memref<1x1x16x16xf32, #tpu.memory_space<vmem>> -> memref<1x1x16x16xf32, #tpu.memory_space<vmem>>
    %12 = tpu.memref_squeeze %11 : memref<1x1x16x16xf32, #tpu.memory_space<vmem>> -> memref<1x16x16xf32, #tpu.memory_space<vmem>>
    %13 = tpu.memref_slice %arg8[%c0_i32_12] : memref<1x!tpu.dma_semaphore, #tpu.memory_space<semaphore_mem>> -> memref<1x!tpu.dma_semaphore, #tpu.memory_space<semaphore_mem>>
    %14 = tpu.memref_squeeze %13 : memref<1x!tpu.dma_semaphore, #tpu.memory_space<semaphore_mem>> -> memref<!tpu.dma_semaphore, #tpu.memory_space<semaphore_mem>>
    tpu.wait_dma2 semaphore(%14 : memref<!tpu.dma_semaphore, #tpu.memory_space<semaphore_mem>>) src(%10 : memref<1x16x16xf32, #tpu.memory_space<any>>) dst(%12 : memref<1x16x16xf32, #tpu.memory_space<vmem>>)
    %c0_18 = arith.constant 0 : index
    %c0_19 = arith.constant 0 : index
    %c0_20 = arith.constant 0 : index
    %c0_21 = arith.constant 0 : index
    %15 = vector.load %arg7[%c0_18, %c0_19, %c0_20, %c0_21] : memref<1x1x16x16xf32, #tpu.memory_space<vmem>>, vector<1x1x16x16xf32>
    %16 = vector.shape_cast %15 : vector<1x1x16x16xf32> to vector<1x16x16xf32>
    "tpu.trace_start"() <{level = 10 : i32, message = "bij,bjd->bid"}> : () -> ()
    %cst = arith.constant dense<0.000000e+00> : vector<1x16x128xf32>
    %17 = tpu.matmul %16, %7, %cst {dimension_numbers = #tpu.dot_dimension_numbers<[2], [1], [1], [2], [0, 0, 0, 1, 1, 2], [0], [0]>} : vector<1x16x16xf32>, vector<1x16x128xf32>, vector<1x16x128xf32> -> vector<1x16x128xf32>
    "tpu.trace_stop"() : () -> ()
    %18 = vector.shape_cast %17 : vector<1x16x128xf32> to vector<16x128xf32>
    %cst_22 = arith.constant dense<0.000000e+00> : vector<16x128xf32>
    %19 = tpu.matmul %18, %9, %cst_22 {dimension_numbers = #tpu.dot_dimension_numbers<[1], [0], [0], [1], [0, 0, 1, 1], [], []>} : vector<16x128xf32>, vector<128x128xf32>, vector<16x128xf32> -> vector<16x128xf32>
    %cst_23 = arith.constant 0.000000e+00 : f32
    %20 = vector.broadcast %cst_23 : f32 to vector<16x128xf32>
    %21 = arith.maximumf %19, %20 : vector<16x128xf32>
    %22 = vector.shape_cast %21 : vector<16x128xf32> to vector<1x16x128xf32>
    %c0_24 = arith.constant 0 : index
    %c0_25 = arith.constant 0 : index
    %c0_26 = arith.constant 0 : index
    %23 = vector.load %arg5[%c0_24, %c0_25, %c0_26] : memref<1x16x128xf32, #tpu.memory_space<vmem>>, vector<1x16x128xf32>
    tpu.vector_store %arg5[%c0_24, %c0_25, %c0_26], %22 {strides = array<i32>} : memref<1x16x128xf32, #tpu.memory_space<vmem>>, vector<1x16x128xf32>,
    %cst_27 = arith.constant dense<0xFF800000> : vector<1x128xf32>
    %24 = vector.multi_reduction <maximumf>, %22, %cst_27 [1] : vector<1x16x128xf32> to vector<1x128xf32>
    %c0_28 = arith.constant 0 : index
    %c0_29 = arith.constant 0 : index
    %c0_30 = arith.constant 0 : index
    %25 = vector.load %arg4[%c0_28, %c0_29, %c0_30] : memref<1x3x128xf32, #tpu.memory_space<vmem>>, vector<1x1x128xf32>
    %26 = vector.shape_cast %25 : vector<1x1x128xf32> to vector<1x128xf32>
    %27 = vector.shape_cast %24 : vector<1x128xf32> to vector<1x1x128xf32>
    tpu.vector_store %arg4[%c0_28, %c0_29, %c0_30], %27 {strides = array<i32>} : memref<1x3x128xf32, #tpu.memory_space<vmem>>, vector<1x1x128xf32>,
    %c0_31 = arith.constant 0 : index
    %c0_32 = arith.constant 0 : index
    %c0_33 = arith.constant 0 : index
    %28 = vector.load %arg5[%c0_31, %c0_32, %c0_33] : memref<1x16x128xf32, #tpu.memory_space<vmem>>, vector<1x16x128xf32>
    %c1 = arith.constant 1 : index
    %c0_34 = arith.constant 0 : index
    %c0_35 = arith.constant 0 : index
    %29 = vector.load %arg3[%c1, %c0_34, %c0_35] : memref<3x128x128xf32, #tpu.memory_space<vmem>>, vector<1x128x128xf32>
    %30 = vector.shape_cast %29 : vector<1x128x128xf32> to vector<128x128xf32>
    %c0_36 = arith.constant 0 : index
    %c0_37 = arith.constant 0 : index
    %c0_38 = arith.constant 0 : index
    %c0_39 = arith.constant 0 : index
    %31 = vector.load %arg7[%c0_36, %c0_37, %c0_38, %c0_39] : memref<1x1x16x16xf32, #tpu.memory_space<vmem>>, vector<1x1x16x16xf32>
    %32 = vector.shape_cast %31 : vector<1x1x16x16xf32> to vector<1x16x16xf32>
    "tpu.trace_start"() <{level = 10 : i32, message = "bij,bjd->bid"}> : () -> ()
    %cst_40 = arith.constant dense<0.000000e+00> : vector<1x16x128xf32>
    %33 = tpu.matmul %32, %28, %cst_40 {dimension_numbers = #tpu.dot_dimension_numbers<[2], [1], [1], [2], [0, 0, 0, 1, 1, 2], [0], [0]>} : vector<1x16x16xf32>, vector<1x16x128xf32>, vector<1x16x128xf32> -> vector<1x16x128xf32>
    "tpu.trace_stop"() : () -> ()
    %34 = vector.shape_cast %33 : vector<1x16x128xf32> to vector<16x128xf32>
    %cst_41 = arith.constant dense<0.000000e+00> : vector<16x128xf32>
    %35 = tpu.matmul %34, %30, %cst_41 {dimension_numbers = #tpu.dot_dimension_numbers<[1], [0], [0], [1], [0, 0, 1, 1], [], []>} : vector<16x128xf32>, vector<128x128xf32>, vector<16x128xf32> -> vector<16x128xf32>
    %cst_42 = arith.constant 0.000000e+00 : f32
    %36 = vector.broadcast %cst_42 : f32 to vector<16x128xf32>
    %37 = arith.maximumf %35, %36 : vector<16x128xf32>
    %38 = vector.shape_cast %37 : vector<16x128xf32> to vector<1x16x128xf32>
    %c0_43 = arith.constant 0 : index
    %c0_44 = arith.constant 0 : index
    %c0_45 = arith.constant 0 : index
    %39 = vector.load %arg6[%c0_43, %c0_44, %c0_45] : memref<1x16x128xf32, #tpu.memory_space<vmem>>, vector<1x16x128xf32>
    tpu.vector_store %arg6[%c0_43, %c0_44, %c0_45], %38 {strides = array<i32>} : memref<1x16x128xf32, #tpu.memory_space<vmem>>, vector<1x16x128xf32>,
    %cst_46 = arith.constant dense<0xFF800000> : vector<1x128xf32>
    %40 = vector.multi_reduction <maximumf>, %38, %cst_46 [1] : vector<1x16x128xf32> to vector<1x128xf32>
    %c0_47 = arith.constant 0 : index
    %c1_48 = arith.constant 1 : index
    %c0_49 = arith.constant 0 : index
    %41 = vector.load %arg4[%c0_47, %c1_48, %c0_49] : memref<1x3x128xf32, #tpu.memory_space<vmem>>, vector<1x1x128xf32>
    %42 = vector.shape_cast %41 : vector<1x1x128xf32> to vector<1x128xf32>
    %43 = vector.shape_cast %40 : vector<1x128xf32> to vector<1x1x128xf32>
    tpu.vector_store %arg4[%c0_47, %c1_48, %c0_49], %43 {strides = array<i32>} : memref<1x3x128xf32, #tpu.memory_space<vmem>>, vector<1x1x128xf32>,
    %c0_50 = arith.constant 0 : index
    %c0_51 = arith.constant 0 : index
    %c0_52 = arith.constant 0 : index
    %44 = vector.load %arg6[%c0_50, %c0_51, %c0_52] : memref<1x16x128xf32, #tpu.memory_space<vmem>>, vector<1x16x128xf32>
    %c2 = arith.constant 2 : index
    %c0_53 = arith.constant 0 : index
    %c0_54 = arith.constant 0 : index
    %45 = vector.load %arg3[%c2, %c0_53, %c0_54] : memref<3x128x128xf32, #tpu.memory_space<vmem>>, vector<1x128x128xf32>
    %46 = vector.shape_cast %45 : vector<1x128x128xf32> to vector<128x128xf32>
    %c0_55 = arith.constant 0 : index
    %c0_56 = arith.constant 0 : index
    %c0_57 = arith.constant 0 : index
    %c0_58 = arith.constant 0 : index
    %47 = vector.load %arg7[%c0_55, %c0_56, %c0_57, %c0_58] : memref<1x1x16x16xf32, #tpu.memory_space<vmem>>, vector<1x1x16x16xf32>
    %48 = vector.shape_cast %47 : vector<1x1x16x16xf32> to vector<1x16x16xf32>
    "tpu.trace_start"() <{level = 10 : i32, message = "bij,bjd->bid"}> : () -> ()
    %cst_59 = arith.constant dense<0.000000e+00> : vector<1x16x128xf32>
    %49 = tpu.matmul %48, %44, %cst_59 {dimension_numbers = #tpu.dot_dimension_numbers<[2], [1], [1], [2], [0, 0, 0, 1, 1, 2], [0], [0]>} : vector<1x16x16xf32>, vector<1x16x128xf32>, vector<1x16x128xf32> -> vector<1x16x128xf32>
    "tpu.trace_stop"() : () -> ()
    %50 = vector.shape_cast %49 : vector<1x16x128xf32> to vector<16x128xf32>
    %cst_60 = arith.constant dense<0.000000e+00> : vector<16x128xf32>
    %51 = tpu.matmul %50, %46, %cst_60 {dimension_numbers = #tpu.dot_dimension_numbers<[1], [0], [0], [1], [0, 0, 1, 1], [], []>} : vector<16x128xf32>, vector<128x128xf32>, vector<16x128xf32> -> vector<16x128xf32>
    %cst_61 = arith.constant 0.000000e+00 : f32
    %52 = vector.broadcast %cst_61 : f32 to vector<16x128xf32>
    %53 = arith.maximumf %51, %52 : vector<16x128xf32>
    %54 = vector.shape_cast %53 : vector<16x128xf32> to vector<1x16x128xf32>
    %cst_62 = arith.constant dense<0xFF800000> : vector<1x128xf32>
    %55 = vector.multi_reduction <maximumf>, %54, %cst_62 [1] : vector<1x16x128xf32> to vector<1x128xf32>
    %c0_63 = arith.constant 0 : index
    %c2_64 = arith.constant 2 : index
    %c0_65 = arith.constant 0 : index
    %56 = vector.load %arg4[%c0_63, %c2_64, %c0_65] : memref<1x3x128xf32, #tpu.memory_space<vmem>>, vector<1x1x128xf32>
    %57 = vector.shape_cast %56 : vector<1x1x128xf32> to vector<1x128xf32>
    %58 = vector.shape_cast %55 : vector<1x128xf32> to vector<1x1x128xf32>
    tpu.vector_store %arg4[%c0_63, %c2_64, %c0_65], %58 {strides = array<i32>} : memref<1x3x128xf32, #tpu.memory_space<vmem>>, vector<1x1x128xf32>,
    return
  }
  func.func @transform_1(%arg0: i32) -> (i32, i32, i32) {
    %c0_i32 = arith.constant 0 : i32
    %c0_i32_0 = arith.constant 0 : i32
    %c0_i32_1 = arith.constant 0 : i32
    return %arg0, %c0_i32, %c0_i32_0 : i32, i32, i32
  }
  func.func @transform_2(%arg0: i32) -> (i32, i32, i32) {
    %c0_i32 = arith.constant 0 : i32
    %c0_i32_0 = arith.constant 0 : i32
    %c0_i32_1 = arith.constant 0 : i32
    %c0_i32_2 = arith.constant 0 : i32
    return %c0_i32, %c0_i32_0, %c0_i32_1 : i32, i32, i32
  }
  func.func @transform_3(%arg0: i32) -> (i32, i32, i32) {
    %c0_i32 = arith.constant 0 : i32
    %c0_i32_0 = arith.constant 0 : i32
    %c0_i32_1 = arith.constant 0 : i32
    return %arg0, %c0_i32, %c0_i32_0 : i32, i32, i32
  }
}

module attributes {stable_mosaic.version = 11 : i64} {
  func.func @kernel(%arg0: i32, %arg1: memref<2x16x16xf32, #tpu.memory_space<any>>, %arg2: memref<1x16x128xf32, #tpu.memory_space<vmem>>, %arg3: memref<3x128x128xf32, #tpu.memory_space<vmem>>, %arg4: memref<1x3x128xf32, #tpu.memory_space<vmem>>, %arg5: memref<1x16x128xf32, #tpu.memory_space<vmem>>, %arg6: memref<1x16x128xf32, #tpu.memory_space<vmem>>, %arg7: memref<1x1x16x16xf32, #tpu.memory_space<vmem>>, %arg8: memref<1x!tpu.dma_semaphore, #tpu.memory_space<semaphore_mem>>) attributes {dimension_semantics = [#tpu.dimension_semantics<parallel>], iteration_bounds = array<i64: 2>, scalar_prefetch = 0 : i64, scratch_operands = 4 : i64, tpu.core_type = #tpu.core_type<tc>, window_params = [{}, {transform_indices = @transform_1, window_bounds = array<i64: 1, 16, 128>}, {pipeline_mode = #tpu.pipeline_mode<synchronous>, transform_indices = @transform_2, window_bounds = array<i64: 3, 128, 128>}, {transform_indices = @transform_3, window_bounds = array<i64: 1, 3, 128>}]} {
    %c1_i32 = arith.constant 1 : i32
    %0 = arith.muli %arg0, %c1_i32 : i32
    %1 = tpu.assume_multiple %0, 1 : i32
    %c0_i32 = arith.constant 0 : i32
    %c0_i32_0 = arith.constant 0 : i32
    %c0_i32_1 = arith.constant 0 : i32
    %c0_i32_2 = arith.constant 0 : i32
    %2 = tpu.memref_slice %arg1[%1, %c0_i32_1, %c0_i32_2] : memref<2x16x16xf32, #tpu.memory_space<any>> -> memref<1x16x16xf32, #tpu.memory_space<any>>
    %c0_i32_3 = arith.constant 0 : i32
    %c0_i32_4 = arith.constant 0 : i32
    %c0_i32_5 = arith.constant 0 : i32
    %3 = tpu.memref_slice %arg7[%c0_i32, %c0_i32_3, %c0_i32_4, %c0_i32_5] : memref<1x1x16x16xf32, #tpu.memory_space<vmem>> -> memref<1x1x16x16xf32, #tpu.memory_space<vmem>>
    %4 = tpu.memref_squeeze %3 : memref<1x1x16x16xf32, #tpu.memory_space<vmem>> -> memref<1x16x16xf32, #tpu.memory_space<vmem>>
    %5 = tpu.memref_slice %arg8[%c0_i32_0] : memref<1x!tpu.dma_semaphore, #tpu.memory_space<semaphore_mem>> -> memref<1x!tpu.dma_semaphore, #tpu.memory_space<semaphore_mem>>
    %6 = tpu.memref_squeeze %5 : memref<1x!tpu.dma_semaphore, #tpu.memory_space<semaphore_mem>> -> memref<!tpu.dma_semaphore, #tpu.memory_space<semaphore_mem>>
    tpu.enqueue_dma source(%2 : memref<1x16x16xf32, #tpu.memory_space<any>>) target(%4 : memref<1x16x16xf32, #tpu.memory_space<vmem>>) target_semaphore(%6 : memref<!tpu.dma_semaphore, #tpu.memory_space<semaphore_mem>>)
    %c0 = arith.constant 0 : index
    %c0_6 = arith.constant 0 : index
    %c0_7 = arith.constant 0 : index
    %7 = vector.load %arg2[%c0, %c0_6, %c0_7] : memref<1x16x128xf32, #tpu.memory_space<vmem>>, vector<1x16x128xf32>
    %c0_8 = arith.constant 0 : index
    %c0_9 = arith.constant 0 : index
    %c0_10 = arith.constant 0 : index
    %8 = vector.load %arg3[%c0_8, %c0_9, %c0_10] : memref<3x128x128xf32, #tpu.memory_space<vmem>>, vector<1x128x128xf32>
    %9 = vector.shape_cast %8 : vector<1x128x128xf32> to vector<128x128xf32>
    %c0_i32_11 = arith.constant 0 : i32
    %c0_i32_12 = arith.constant 0 : i32
    %c0_i32_13 = arith.constant 0 : i32
    %c0_i32_14 = arith.constant 0 : i32
    %10 = tpu.memref_slice %arg1[%1, %c0_i32_13, %c0_i32_14] : memref<2x16x16xf32, #tpu.memory_space<any>> -> memref<1x16x16xf32, #tpu.memory_space<any>>
    %c0_i32_15 = arith.constant 0 : i32
    %c0_i32_16 = arith.constant 0 : i32
    %c0_i32_17 = arith.constant 0 : i32
    %11 = tpu.memref_slice %arg7[%c0_i32_11, %c0_i32_15, %c0_i32_16, %c0_i32_17] : memref<1x1x16x16xf32, #tpu.memory_space<vmem>> -> memref<1x1x16x16xf32, #tpu.memory_space<vmem>>
    %12 = tpu.memref_squeeze %11 : memref<1x1x16x16xf32, #tpu.memory_space<vmem>> -> memref<1x16x16xf32, #tpu.memory_space<vmem>>
    %13 = tpu.memref_slice %arg8[%c0_i32_12] : memref<1x!tpu.dma_semaphore, #tpu.memory_space<semaphore_mem>> -> memref<1x!tpu.dma_semaphore, #tpu.memory_space<semaphore_mem>>
    %14 = tpu.memref_squeeze %13 : memref<1x!tpu.dma_semaphore, #tpu.memory_space<semaphore_mem>> -> memref<!tpu.dma_semaphore, #tpu.memory_space<semaphore_mem>>
    tpu.wait_dma2 semaphore(%14 : memref<!tpu.dma_semaphore, #tpu.memory_space<semaphore_mem>>) src(%10 : memref<1x16x16xf32, #tpu.memory_space<any>>) dst(%12 : memref<1x16x16xf32, #tpu.memory_space<vmem>>)
    %c0_18 = arith.constant 0 : index
    %c0_19 = arith.constant 0 : index
    %c0_20 = arith.constant 0 : index
    %c0_21 = arith.constant 0 : index
    %15 = vector.load %arg7[%c0_18, %c0_19, %c0_20, %c0_21] : memref<1x1x16x16xf32, #tpu.memory_space<vmem>>, vector<1x1x16x16xf32>
    %16 = vector.shape_cast %15 : vector<1x1x16x16xf32> to vector<1x16x16xf32>
    "tpu.trace_start"() <{level = 10 : i32, message = "bij,bjd->bid"}> : () -> ()
    %cst = arith.constant dense<0.000000e+00> : vector<1x16x128xf32>
    %17 = tpu.matmul %16, %7, %cst {dimension_numbers = #tpu.dot_dimension_numbers<[2], [1], [1], [2], [0, 0, 0, 1, 1, 2], [0], [0]>} : vector<1x16x16xf32>, vector<1x16x128xf32>, vector<1x16x128xf32> -> vector<1x16x128xf32>
    "tpu.trace_stop"() : () -> ()
    %18 = vector.shape_cast %17 : vector<1x16x128xf32> to vector<16x128xf32>
    %cst_22 = arith.constant dense<0.000000e+00> : vector<16x128xf32>
    %19 = tpu.matmul %18, %9, %cst_22 {dimension_numbers = #tpu.dot_dimension_numbers<[1], [0], [0], [1], [0, 0, 1, 1], [], []>} : vector<16x128xf32>, vector<128x128xf32>, vector<16x128xf32> -> vector<16x128xf32>
    %cst_23 = arith.constant 0.000000e+00 : f32
    %20 = vector.broadcast %cst_23 : f32 to vector<16x128xf32>
    %21 = arith.maximumf %19, %20 : vector<16x128xf32>
    %22 = vector.shape_cast %21 : vector<16x128xf32> to vector<1x16x128xf32>
    %c0_24 = arith.constant 0 : index
    %c0_25 = arith.constant 0 : index
    %c0_26 = arith.constant 0 : index
    %23 = vector.load %arg5[%c0_24, %c0_25, %c0_26] : memref<1x16x128xf32, #tpu.memory_space<vmem>>, vector<1x16x128xf32>
    tpu.vector_store %arg5[%c0_24, %c0_25, %c0_26], %22 {strides = array<i32>} : memref<1x16x128xf32, #tpu.memory_space<vmem>>, vector<1x16x128xf32>,
    %cst_27 = arith.constant dense<0xFF800000> : vector<1x128xf32>
    %24 = vector.multi_reduction <maximumf>, %22, %cst_27 [1] : vector<1x16x128xf32> to vector<1x128xf32>
    %c0_28 = arith.constant 0 : index
    %c0_29 = arith.constant 0 : index
    %c0_30 = arith.constant 0 : index
    %25 = vector.load %arg4[%c0_28, %c0_29, %c0_30] : memref<1x3x128xf32, #tpu.memory_space<vmem>>, vector<1x1x128xf32>
    %26 = vector.shape_cast %25 : vector<1x1x128xf32> to vector<1x128xf32>
    %27 = vector.shape_cast %24 : vector<1x128xf32> to vector<1x1x128xf32>
    tpu.vector_store %arg4[%c0_28, %c0_29, %c0_30], %27 {strides = array<i32>} : memref<1x3x128xf32, #tpu.memory_space<vmem>>, vector<1x1x128xf32>,
    %c0_31 = arith.constant 0 : index
    %c0_32 = arith.constant 0 : index
    %c0_33 = arith.constant 0 : index
    %28 = vector.load %arg5[%c0_31, %c0_32, %c0_33] : memref<1x16x128xf32, #tpu.memory_space<vmem>>, vector<1x16x128xf32>
    %c1 = arith.constant 1 : index
    %c0_34 = arith.constant 0 : index
    %c0_35 = arith.constant 0 : index
    %29 = vector.load %arg3[%c1, %c0_34, %c0_35] : memref<3x128x128xf32, #tpu.memory_space<vmem>>, vector<1x128x128xf32>
    %30 = vector.shape_cast %29 : vector<1x128x128xf32> to vector<128x128xf32>
    %c0_36 = arith.constant 0 : index
    %c0_37 = arith.constant 0 : index
    %c0_38 = arith.constant 0 : index
    %c0_39 = arith.constant 0 : index
    %31 = vector.load %arg7[%c0_36, %c0_37, %c0_38, %c0_39] : memref<1x1x16x16xf32, #tpu.memory_space<vmem>>, vector<1x1x16x16xf32>
    %32 = vector.shape_cast %31 : vector<1x1x16x16xf32> to vector<1x16x16xf32>
    "tpu.trace_start"() <{level = 10 : i32, message = "bij,bjd->bid"}> : () -> ()
    %cst_40 = arith.constant dense<0.000000e+00> : vector<1x16x128xf32>
    %33 = tpu.matmul %32, %28, %cst_40 {dimension_numbers = #tpu.dot_dimension_numbers<[2], [1], [1], [2], [0, 0, 0, 1, 1, 2], [0], [0]>} : vector<1x16x16xf32>, vector<1x16x128xf32>, vector<1x16x128xf32> -> vector<1x16x128xf32>
    "tpu.trace_stop"() : () -> ()
    %34 = vector.shape_cast %33 : vector<1x16x128xf32> to vector<16x128xf32>
    %cst_41 = arith.constant dense<0.000000e+00> : vector<16x128xf32>
    %35 = tpu.matmul %34, %30, %cst_41 {dimension_numbers = #tpu.dot_dimension_numbers<[1], [0], [0], [1], [0, 0, 1, 1], [], []>} : vector<16x128xf32>, vector<128x128xf32>, vector<16x128xf32> -> vector<16x128xf32>
    %cst_42 = arith.constant 0.000000e+00 : f32
    %36 = vector.broadcast %cst_42 : f32 to vector<16x128xf32>
    %37 = arith.maximumf %35, %36 : vector<16x128xf32>
    %38 = vector.shape_cast %37 : vector<16x128xf32> to vector<1x16x128xf32>
    %c0_43 = arith.constant 0 : index
    %c0_44 = arith.constant 0 : index
    %c0_45 = arith.constant 0 : index
    %39 = vector.load %arg6[%c0_43, %c0_44, %c0_45] : memref<1x16x128xf32, #tpu.memory_space<vmem>>, vector<1x16x128xf32>
    tpu.vector_store %arg6[%c0_43, %c0_44, %c0_45], %38 {strides = array<i32>} : memref<1x16x128xf32, #tpu.memory_space<vmem>>, vector<1x16x128xf32>,
    %cst_46 = arith.constant dense<0xFF800000> : vector<1x128xf32>
    %40 = vector.multi_reduction <maximumf>, %38, %cst_46 [1] : vector<1x16x128xf32> to vector<1x128xf32>
    %c0_47 = arith.constant 0 : index
    %c1_48 = arith.constant 1 : index
    %c0_49 = arith.constant 0 : index
    %41 = vector.load %arg4[%c0_47, %c1_48, %c0_49] : memref<1x3x128xf32, #tpu.memory_space<vmem>>, vector<1x1x128xf32>
    %42 = vector.shape_cast %41 : vector<1x1x128xf32> to vector<1x128xf32>
    %43 = vector.shape_cast %40 : vector<1x128xf32> to vector<1x1x128xf32>
    tpu.vector_store %arg4[%c0_47, %c1_48, %c0_49], %43 {strides = array<i32>} : memref<1x3x128xf32, #tpu.memory_space<vmem>>, vector<1x1x128xf32>,
    %c0_50 = arith.constant 0 : index
    %c0_51 = arith.constant 0 : index
    %c0_52 = arith.constant 0 : index
    %44 = vector.load %arg6[%c0_50, %c0_51, %c0_52] : memref<1x16x128xf32, #tpu.memory_space<vmem>>, vector<1x16x128xf32>
    %c2 = arith.constant 2 : index
    %c0_53 = arith.constant 0 : index
    %c0_54 = arith.constant 0 : index
    %45 = vector.load %arg3[%c2, %c0_53, %c0_54] : memref<3x128x128xf32, #tpu.memory_space<vmem>>, vector<1x128x128xf32>
    %46 = vector.shape_cast %45 : vector<1x128x128xf32> to vector<128x128xf32>
    %c0_55 = arith.constant 0 : index
    %c0_56 = arith.constant 0 : index
    %c0_57 = arith.constant 0 : index
    %c0_58 = arith.constant 0 : index
    %47 = vector.load %arg7[%c0_55, %c0_56, %c0_57, %c0_58] : memref<1x1x16x16xf32, #tpu.memory_space<vmem>>, vector<1x1x16x16xf32>
    %48 = vector.shape_cast %47 : vector<1x1x16x16xf32> to vector<1x16x16xf32>
    "tpu.trace_start"() <{level = 10 : i32, message = "bij,bjd->bid"}> : () -> ()
    %cst_59 = arith.constant dense<0.000000e+00> : vector<1x16x128xf32>
    %49 = tpu.matmul %48, %44, %cst_59 {dimension_numbers = #tpu.dot_dimension_numbers<[2], [1], [1], [2], [0, 0, 0, 1, 1, 2], [0], [0]>} : vector<1x16x16xf32>, vector<1x16x128xf32>, vector<1x16x128xf32> -> vector<1x16x128xf32>
    "tpu.trace_stop"() : () -> ()
    %50 = vector.shape_cast %49 : vector<1x16x128xf32> to vector<16x128xf32>
    %cst_60 = arith.constant dense<0.000000e+00> : vector<16x128xf32>
    %51 = tpu.matmul %50, %46, %cst_60 {dimension_numbers = #tpu.dot_dimension_numbers<[1], [0], [0], [1], [0, 0, 1, 1], [], []>} : vector<16x128xf32>, vector<128x128xf32>, vector<16x128xf32> -> vector<16x128xf32>
    %cst_61 = arith.constant 0.000000e+00 : f32
    %52 = vector.broadcast %cst_61 : f32 to vector<16x128xf32>
    %53 = arith.maximumf %51, %52 : vector<16x128xf32>
    %54 = vector.shape_cast %53 : vector<16x128xf32> to vector<1x16x128xf32>
    %cst_62 = arith.constant dense<0xFF800000> : vector<1x128xf32>
    %55 = vector.multi_reduction <maximumf>, %54, %cst_62 [1] : vector<1x16x128xf32> to vector<1x128xf32>
    %c0_63 = arith.constant 0 : index
    %c2_64 = arith.constant 2 : index
    %c0_65 = arith.constant 0 : index
    %56 = vector.load %arg4[%c0_63, %c2_64, %c0_65] : memref<1x3x128xf32, #tpu.memory_space<vmem>>, vector<1x1x128xf32>
    %57 = vector.shape_cast %56 : vector<1x1x128xf32> to vector<1x128xf32>
    %58 = vector.shape_cast %55 : vector<1x128xf32> to vector<1x1x128xf32>
    tpu.vector_store %arg4[%c0_63, %c2_64, %c0_65], %58 {strides = array<i32>} : memref<1x3x128xf32, #tpu.memory_space<vmem>>, vector<1x1x128xf32>,
    return
  }
  func.func @transform_1(%arg0: i32) -> (i32, i32, i32) {
    %c0_i32 = arith.constant 0 : i32
    %c0_i32_0 = arith.constant 0 : i32
    %c0_i32_1 = arith.constant 0 : i32
    return %arg0, %c0_i32, %c0_i32_0 : i32, i32, i32
  }
  func.func @transform_2(%arg0: i32) -> (i32, i32, i32) {
    %c0_i32 = arith.constant 0 : i32
    %c0_i32_0 = arith.constant 0 : i32
    %c0_i32_1 = arith.constant 0 : i32
    %c0_i32_2 = arith.constant 0 : i32
    return %c0_i32, %c0_i32_0, %c0_i32_1 : i32, i32, i32
  }
  func.func @transform_3(%arg0: i32) -> (i32, i32, i32) {
    %c0_i32 = arith.constant 0 : i32
    %c0_i32_0 = arith.constant 0 : i32
    %c0_i32_1 = arith.constant 0 : i32
    return %arg0, %c0_i32, %c0_i32_0 : i32, i32, i32
  }
}

</mosaic_0001>

<llo_original>
// kernel: tpu_custom_call.1
$region0: #{tpu_custom_call.1}
  #allocation0 [shape = 'u32[]', space=smem, size = 0x4, offset = 0x4, fixed_abs, tag = 'smem constant byte address 0x4 - core index']
  #allocation1 [shape = 'u32[144,128]{1,0:T(1,128)}', space=vmem, size = 0x12000, scoped, tag = 'internal scratch']
  #allocation2 [shape = 'f32[1,16,128]{2,1,0:T(8,128)}', space=vmem, size = 0x2000, scoped, tag = 'scratch operand']
  #allocation3 [shape = 'f32[1,16,128]{2,1,0:T(8,128)}', space=vmem, size = 0x2000, scoped, tag = 'scratch operand']
  #allocation4 [shape = 'f32[1,1,16,16]{3,2,1,0:T(8,128)}', space=vmem, size = 0x2000, scoped, tag = 'scratch operand']
  #allocation5 [shape = 's32[1]{0}', space=sflag, size = 0x4, scoped, tag = 'scratch operand']
  #allocation10 [shape = 's32[]', space=sflag, size = 0x4, offset = 0, fixed_abs, tag = 'sflag constant byte address 0x0 - dummy sync flag']
  #allocation11 [shape = 's32[]', space=sflag, size = 0x4, offset = 0, fixed_abs, tag = 'sflag constant byte address 0x0 - dummy sync flag']
  #allocation12 [shape = 'u32[]', space=smem, size = 0x4, offset = 0x44, fixed_abs, tag = 'smem constant byte address 0x44 - assertion arg 0']
  #allocation13 [shape = 'u32[]', space=smem, size = 0x4, offset = 0x48, fixed_abs, tag = 'smem constant byte address 0x48 - assertion arg 1']
  %s0 = inlined_call_operand.hbm [shape: f32[2,16,16], index: 0, kind: input, shape index: {}]
  %s1 = inlined_call_operand.hbm [shape: f32[2,16,128], index: 1, kind: input, shape index: {}]
  %s2 = inlined_call_operand.hbm [shape: f32[3,128,128], index: 2, kind: input, shape index: {}]
  %s3 = inlined_call_operand.vmem [shape: f32[2,3,128], index: 3, kind: output, shape index: {}]
  %s4 = sld [smem:[#allocation0]]
  $region53: #{tpu_custom_call.1} parent=0
    _
  %s6 = ssub.s32 1, %s4
  %s7 = scalar_select 0, %s6, %s4
  $region1: #{tpu_custom_call.1} parent=0
    #allocation6 [shape = 'u8[16384]{0}', space=vmem, size = 0x4000, scoped, tag = 'input window, operand 1']
    #allocation7 [shape = 's32[2]{0}', space=sflag, size = 0x8, scoped, tag = 'scoped memory for tpu_custom_call.1']
    #allocation8 [shape = 'u8[196608]{0}', space=vmem, size = 0x30000, scoped, tag = 'input window, operand 2, single buffered']
    #allocation9 [shape = 's32[1]{0}', space=sflag, size = 0x4, scoped, tag = 'scoped memory for tpu_custom_call.1']
    %8 = vsyncpa [#allocation7], 0
    %s9 = scalar_lea.sflag [#allocation7], 1
    %10 = vsyncpa %s9, 0
    %11 = vsyncpa [#allocation9], 0
    loop: start=0, step=1, limit=4
    $region2: #{tpu_custom_call.1} parent=1 // loop_pre_header
      _
    $region3: #{tpu_custom_call.1} parent=1 // loop_header
      %s13 = sphi 0, %s17
      %p14 = scmp.ge.s32.totalorder %s13, 4
      %s23 = sphi 0, %s25
      %s26 = sphi 0, %s23
      %s27 = sphi 0, %s26
      %s43 = sphi 0, %s27
      %s47 = sphi 0, %s47
      %s49 = sphi 0, %s47
      %s50 = sphi 0, %s49
      %s64 = sphi 0, %s50
      %s70 = sphi 0, %s72
      %s73 = sphi 0, %s70
      %s74 = sphi 0, %s73
      %s90 = sphi 0, %s74
    $region4: #{tpu_custom_call.1} parent=1 // loop_header_branch
      %16 = sbr.rel (%p14) target = $region8
    $region5: #{tpu_custom_call.1} parent=1 // loop_body
      %s18 = ssub.s32 %s13, 1
      %s19 = ssub.s32 %s13, 2
      %s20 = sadd.s32 %s13, 1
      %s21 = ssub.s32 %s13, %s20
      %p22 = scmp.eq.s32.totalorder %s21, 0
      %s24 = sadd.s32 %s23, 1
      %s25 = scalar_select %p22, %s23, %s24
      %p28 = pneg %p22
      %p29 = scmp.eq.s32.totalorder %s13, 1
      %p30 = por %p28, %p29
      %p31 = scmp.ne.s32.totalorder %s23, %s26
      %p32 = scmp.eq.s32.totalorder %s13, 0
      %p33 = por %p31, %p32
      %p34 = scmp.ne.s32.totalorder %s23, %s26
      %p35 = scmp.eq.s32.totalorder %s18, 1
      %p36 = por %p34, %p35
      %p37 = scmp.ne.s32.totalorder %s26, %s27
      %p38 = scmp.eq.s32.totalorder %s18, 0
      %p39 = por %p37, %p38
      %p40 = scmp.ne.s32.totalorder %s26, %s27
      %p41 = scmp.eq.s32.totalorder %s19, 1
      %p42 = por %p40, %p41
      %p44 = scmp.ne.s32.totalorder %s27, %s43
      %p45 = scmp.eq.s32.totalorder %s19, 0
      %p46 = por %p44, %p45
      %s48 = sadd.s32 %s47, 1
      %p51 = scmp.eq.s32.totalorder %s13, 1
      %p52 = scmp.ne.s32.totalorder %s47, %s49
      %p53 = scmp.eq.s32.totalorder %s13, 0
      %p54 = por %p52, %p53
      %p55 = scmp.ne.s32.totalorder %s47, %s49
      %p56 = scmp.eq.s32.totalorder %s18, 1
      %p57 = por %p55, %p56
      %p58 = scmp.ne.s32.totalorder %s49, %s50
      %p59 = scmp.eq.s32.totalorder %s18, 0
      %p60 = por %p58, %p59
      %p61 = scmp.ne.s32.totalorder %s49, %s50
      %p62 = scmp.eq.s32.totalorder %s19, 1
      %p63 = por %p61, %p62
      %p65 = scmp.ne.s32.totalorder %s50, %s64
      %p66 = scmp.eq.s32.totalorder %s19, 0
      %p67 = por %p65, %p66
      %s68 = ssub.s32 %s13, %s20
      %p69 = scmp.eq.s32.totalorder %s68, 0
      %s71 = sadd.s32 %s70, 1
      %s72 = scalar_select %p69, %s70, %s71
      %p75 = pneg %p69
      %p76 = scmp.eq.s32.totalorder %s13, 1
      %p77 = por %p75, %p76
      %p78 = scmp.ne.s32.totalorder %s70, %s73
      %p79 = scmp.eq.s32.totalorder %s13, 0
      %p80 = por %p78, %p79
      %p81 = scmp.ne.s32.totalorder %s70, %s73
      %p82 = scmp.eq.s32.totalorder %s18, 1
      %p83 = por %p81, %p82
      %p84 = scmp.ne.s32.totalorder %s73, %s74
      %p85 = scmp.eq.s32.totalorder %s18, 0
      %p86 = por %p84, %p85
      %p87 = scmp.ne.s32.totalorder %s73, %s74
      %p88 = scmp.eq.s32.totalorder %s19, 1
      %p89 = por %p87, %p88
      %p91 = scmp.ne.s32.totalorder %s74, %s90
      %p92 = scmp.eq.s32.totalorder %s19, 0
      %p93 = por %p91, %p92
      %p94 = scmp.le.s32.totalorder 1, %s13
      %p95 = scmp.lt.s32.totalorder %s13, 3
      %p96 = pnand %p94, %p95
      %p97 = pneg %p96
      // Predicated region
      $region9: #{tpu_custom_call.1} parent=5 // pred_check
        _
      $region10: #{tpu_custom_call.1} parent=5 // pred_check_branch
        %99 = sbr.rel (%p96) target = $region12
      $region11: #{tpu_custom_call.1} parent=5 // pred_region
        %s100 = ssub.s32 %s13, 1
        // Predicated region
        $region13: #{tpu_custom_call.1} parent=11 // pred_check
          %p101 = pneg %p60
        $region14: #{tpu_custom_call.1} parent=11 // pred_check_branch
          %103 = sbr.rel (%p101) target = $region16
        $region15: #{tpu_custom_call.1} parent=11 // pred_region
          %s105 = ssub.s32 6144, 6144
          %106 = vsyncadd [#allocation9], %s105
          %s107 = sshll.u32 [#allocation8], 4
          %s108 = int_to_ptr.vmem [resolvable:$true] %s107
          %113 = dma.hbm_to_vmem [thread:$0]  %s2, 6144, %s108, [#allocation9], 128, 128, 8
        $region16: #{tpu_custom_call.1} parent=11 // pred_fallthru
          _
      $region12: #{tpu_custom_call.1} parent=5 // pred_fallthru
        _
      %p114 = scmp.lt.s32.totalorder %s13, 2
      // Predicated region
      $region17: #{tpu_custom_call.1} parent=5 // pred_check
        %p115 = pneg %p114
      $region18: #{tpu_custom_call.1} parent=5 // pred_check_branch
        %117 = sbr.rel (%p115) target = $region20
      $region19: #{tpu_custom_call.1} parent=5 // pred_region
        // Predicated region
        $region21: #{tpu_custom_call.1} parent=19 // pred_check
          %p118 = pneg %p33
        $region22: #{tpu_custom_call.1} parent=19 // pred_check_branch
          %120 = sbr.rel (%p118) target = $region24
        $region23: #{tpu_custom_call.1} parent=19 // pred_region
          %s121 = sand.u32 %s23, 1
          %s122 = scalar_lea.sflag [#allocation7], %s121
          %s123 = sand.u32 %s23, 1
          %s124 = smul.addr %s123, 16
          %s125 = scalar_lea.vmem [#allocation6], %s124
          %s127 = ssub.s32 256, 256
          %128 = vsyncadd %s122, %s127
          %s129 = smul.addr %s13, 2
          %s130 = smul.addr %s129, 128
          %s131 = scalar_lea.hbm %s1, %s130
          %s132 = sshll.u32 %s125, 4
          %s133 = int_to_ptr.vmem [resolvable:$true] %s132
          %138 = dma.hbm_to_vmem [thread:$0]  %s131, 256, %s133, %s122, 128, 128, 8
        $region24: #{tpu_custom_call.1} parent=19 // pred_fallthru
          _
      $region20: #{tpu_custom_call.1} parent=5 // pred_fallthru
        _
      %p139 = scmp.le.s32.totalorder 1, %s13
      %p140 = scmp.lt.s32.totalorder %s13, 3
      %p141 = pnand %p139, %p140
      %p142 = pneg %p141
      // Predicated region
      $region25: #{tpu_custom_call.1} parent=5 // pred_check
        _
      $region26: #{tpu_custom_call.1} parent=5 // pred_check_branch
        %144 = sbr.rel (%p141) target = $region28
      $region27: #{tpu_custom_call.1} parent=5 // pred_region
        %s145 = ssub.s32 %s13, 1
        %s146 = sand.u32 %s26, 1
        %s147 = scalar_lea.sflag [#allocation7], %s146
        %s148 = sand.u32 %s26, 1
        %s149 = smul.addr %s148, 16
        %s150 = scalar_lea.vmem [#allocation6], %s149
        // Predicated region
        $region29: #{tpu_custom_call.1} parent=27 // pred_check
          %p151 = pneg %p39
        $region30: #{tpu_custom_call.1} parent=27 // pred_check_branch
          %153 = sbr.rel (%p151) target = $region32
        $region31: #{tpu_custom_call.1} parent=27 // pred_region
          %154 = dma.done %s147, 256
        $region32: #{tpu_custom_call.1} parent=27 // pred_fallthru
          _
        // Predicated region
        $region33: #{tpu_custom_call.1} parent=27 // pred_check
          %p155 = pneg %p60
        $region34: #{tpu_custom_call.1} parent=27 // pred_check_branch
          %157 = sbr.rel (%p155) target = $region36
        $region35: #{tpu_custom_call.1} parent=27 // pred_region
          %158 = dma.done [#allocation9], 6144
        $region36: #{tpu_custom_call.1} parent=27 // pred_fallthru
          _
        %s159 = sand.u32 %s26, 1
        %s160 = scalar_lea.sflag [#allocation7], %s159
        %s161 = sand.u32 %s26, 1
        %s162 = smul.addr %s161, 16
        %s163 = scalar_lea.vmem [#allocation6], %s162
        %p164 = pneg %p39
        %p165 = pneg %p36
        %p166 = pneg %p60
        %p167 = pneg %p57
        %p168 = pneg %p86
        %p169 = pneg %p83
        %p170 = scmp.lt.s32.totalorder %s18, 1
        %s171 = scalar_select %p170, %s18, 1
        %s172 = smul.addr %s171, 4
        %s173 = scalar_lea.vmem %s3, %s172
        %p174 = scmp.lt.s32.totalorder %s18, 1
        %s175 = scalar_select %p174, %s18, 1
        %s176 = smul.addr %s175, 4
        %s177 = scalar_lea.vmem %s3, %s176
        %s178 = smul.u32 %s18, 16
        %s179 = smul.addr %s178, 16
        %s180 = scalar_lea.hbm %s0, %s179
        // Predicated region
        $region37: #{tpu_custom_call.1} parent=27 // pred_check
          _
        $region38: #{tpu_custom_call.1} parent=27 // pred_check_branch
          %182 = sbr.rel target = $region40
        $region39: #{tpu_custom_call.1} parent=27 // pred_region
          %183 = sst [smem:[#allocation12]] [#allocation11]
          %184 = sst [smem:[#allocation13]] [#allocation10]
        $region40: #{tpu_custom_call.1} parent=27 // pred_fallthru
          _
        %186 = shalt.err (0)
        %s188 = sshll.u32 [#allocation4], 4
        %s189 = int_to_ptr.vmem [resolvable:$true] %s188
        %191 = dma.hbm_to_vmem [thread:$0]  %s180, 256, %s189, [#allocation5]
        %v192 = vld [vmem:[%s150] sm:$0xff]
        %v193 = vld [vmem:[%s150 + $0x8] sm:$0xff]
        %v194 = vld [vmem:[#allocation8] sm:$0xff]
        %v195 = vld [vmem:[#allocation8 + $0x8] sm:$0xff]
        %v196 = vld [vmem:[#allocation8 + $0x10] sm:$0xff]
        %v197 = vld [vmem:[#allocation8 + $0x18] sm:$0xff]
        %v198 = vld [vmem:[#allocation8 + $0x20] sm:$0xff]
        %v199 = vld [vmem:[#allocation8 + $0x28] sm:$0xff]
        %v200 = vld [vmem:[#allocation8 + $0x30] sm:$0xff]
        %v201 = vld [vmem:[#allocation8 + $0x38] sm:$0xff]
        %v202 = vld [vmem:[#allocation8 + $0x40] sm:$0xff]
        %v203 = vld [vmem:[#allocation8 + $0x48] sm:$0xff]
        %v204 = vld [vmem:[#allocation8 + $0x50] sm:$0xff]
        %v205 = vld [vmem:[#allocation8 + $0x58] sm:$0xff]
        %v206 = vld [vmem:[#allocation8 + $0x60] sm:$0xff]
        %v207 = vld [vmem:[#allocation8 + $0x68] sm:$0xff]
        %v208 = vld [vmem:[#allocation8 + $0x70] sm:$0xff]
        %v209 = vld [vmem:[#allocation8 + $0x78] sm:$0xff]
        %s210 = smul.u32 1, 16
        %s211 = smul.u32 %s210, 1
        %s212 = sshll.u32 %s211, 4
        %213 = dma.done [#allocation5], %s212
        %v214 = vld [vmem:[#allocation4] sm:$0xff]
        %v215 = vld [vmem:[#allocation4 + $0x8] sm:$0xff]
        %vm216 = vcmask 130048
        %v218 = vsel %vm216, %v214, 0
        %v221 = vsel %vm216, %v215, 0
        %223 = vmatprep.subr.mxu0 0.0
        %224 = vmatpush1.msra.mxu0 0.0
        %225 = vmatprep.subr.mxu0 0.0
        %226 = vmatpush1.msra.mxu0 0.0
        %227 = vmatprep.subr.mxu0 0.0
        %228 = vmatpush1.msra.mxu0 0.0
        %229 = vmatprep.subr.mxu0 0.0
        %230 = vmatpush1.msra.mxu0 0.0
        %231 = vmatprep.subr.mxu0 0.0
        %232 = vmatpush1.msra.mxu0 0.0
        %233 = vmatprep.subr.mxu0 0.0
        %234 = vmatpush1.msra.mxu0 0.0
        %235 = vmatprep.subr.mxu0 0.0
        %236 = vmatpush1.msra.mxu0 0.0
        %237 = vmatprep.subr.mxu0 0.0
        %238 = vmatpush1.msra.mxu0 0.0
        %239 = vmatprep.subr.mxu0 0.0
        %240 = vmatpush1.msra.mxu0 0.0
        %241 = vmatprep.subr.mxu0 0.0
        %242 = vmatpush1.msra.mxu0 0.0
        %243 = vmatprep.subr.mxu0 0.0
        %244 = vmatpush1.msra.mxu0 0.0
        %245 = vmatprep.subr.mxu0 0.0
        %246 = vmatpush1.msra.mxu0 0.0
        %247 = vmatprep.subr.mxu0 0.0
        %248 = vmatpush1.msra.mxu0 0.0
        %249 = vmatprep.subr.mxu0 0.0
        %250 = vmatpush1.msra.mxu0 0.0
        %251 = vmatprep.subr.mxu0 0.0
        %252 = vmatpush1.msra.mxu0 %v193
        %253 = vmatprep.subr.mxu0 0.0
        %254 = vmatpush1.msra.mxu0 %v192
        %255 = vmatprep.subr.mxu0 0.0
        %256 = vmatpush2.msra.mxu0 0.0
        %257 = vmatprep.subr.mxu0 0.0
        %258 = vmatpush2.msra.mxu0 0.0
        %259 = vmatprep.subr.mxu0 0.0
        %260 = vmatpush2.msra.mxu0 0.0
        %261 = vmatprep.subr.mxu0 0.0
        %262 = vmatpush2.msra.mxu0 0.0
        %263 = vmatprep.subr.mxu0 0.0
        %264 = vmatpush2.msra.mxu0 0.0
        %265 = vmatprep.subr.mxu0 0.0
        %266 = vmatpush2.msra.mxu0 0.0
        %267 = vmatprep.subr.mxu0 0.0
        %268 = vmatpush2.msra.mxu0 0.0
        %269 = vmatprep.subr.mxu0 0.0
        %270 = vmatpush2.msra.mxu0 0.0
        %271 = vmatprep.subr.mxu0 0.0
        %272 = vmatpush2.msra.mxu0 0.0
        %273 = vmatprep.subr.mxu0 0.0
        %274 = vmatpush2.msra.mxu0 0.0
        %275 = vmatprep.subr.mxu0 0.0
        %276 = vmatpush2.msra.mxu0 0.0
        %277 = vmatprep.subr.mxu0 0.0
        %278 = vmatpush2.msra.mxu0 0.0
        %279 = vmatprep.subr.mxu0 0.0
        %280 = vmatpush2.msra.mxu0 0.0
        %281 = vmatprep.subr.mxu0 0.0
        %282 = vmatpush2.msra.mxu0 0.0
        %283 = vmatprep.subr.mxu0 0.0
        %284 = vmatpush2.msra.mxu0 0.0
        %285 = vmatprep.subr.mxu0 0.0
        %286 = vmatpush2.msra.mxu0 0.0
        %287 = vmatprep.mubr.f32.mxu0 0.0
        %288 = vmatmul.mubr.f32.gmra.mxu0 %v218
        %v289 = vpop.f32.mrf.mxu0
        %v290 = vadd.f32 0.0, %v289
        %v291 = vpop.f32.mrf.mxu0
        %292 = vmatprep.mubr.f32.mxu0 0.0
        %293 = vmatmul.mubr.f32.gmra.mxu0 %v221
        %v294 = vpop.f32.mrf.mxu0
        %v295 = vadd.f32 0.0, %v294
        %v296 = vpop.f32.mrf.mxu0
        %297 = vdwg.mxu0
        %298 = vmatprep.subr.mxu0 0.0
        %299 = vmatpush1.msra.mxu0 %v209
        %300 = vmatprep.subr.mxu0 0.0
        %301 = vmatpush1.msra.mxu0 %v208
        %302 = vmatprep.subr.mxu0 0.0
        %303 = vmatpush1.msra.mxu0 %v207
        %304 = vmatprep.subr.mxu0 0.0
        %305 = vmatpush1.msra.mxu0 %v206
        %306 = vmatprep.subr.mxu0 0.0
        %307 = vmatpush1.msra.mxu0 %v205
        %308 = vmatprep.subr.mxu0 0.0
        %309 = vmatpush1.msra.mxu0 %v204
        %310 = vmatprep.subr.mxu0 0.0
        %311 = vmatpush1.msra.mxu0 %v203
        %312 = vmatprep.subr.mxu0 0.0
        %313 = vmatpush1.msra.mxu0 %v202
        %314 = vmatprep.subr.mxu0 0.0
        %315 = vmatpush1.msra.mxu0 %v201
        %316 = vmatprep.subr.mxu0 0.0
        %317 = vmatpush1.msra.mxu0 %v200
        %318 = vmatprep.subr.mxu0 0.0
        %319 = vmatpush1.msra.mxu0 %v199
        %320 = vmatprep.subr.mxu0 0.0
        %321 = vmatpush1.msra.mxu0 %v198
        %322 = vmatprep.subr.mxu0 0.0
        %323 = vmatpush1.msra.mxu0 %v197
        %324 = vmatprep.subr.mxu0 0.0
        %325 = vmatpush1.msra.mxu0 %v196
        %326 = vmatprep.subr.mxu0 0.0
        %327 = vmatpush1.msra.mxu0 %v195
        %328 = vmatprep.subr.mxu0 0.0
        %329 = vmatpush1.msra.mxu0 %v194
        %330 = vmatprep.subr.mxu0 0.0
        %331 = vmatpush2.msra.mxu0 0.0
        %332 = vmatprep.subr.mxu0 0.0
        %333 = vmatpush2.msra.mxu0 0.0
        %334 = vmatprep.subr.mxu0 0.0
        %335 = vmatpush2.msra.mxu0 0.0
        %336 = vmatprep.subr.mxu0 0.0
        %337 = vmatpush2.msra.mxu0 0.0
        %338 = vmatprep.subr.mxu0 0.0
        %339 = vmatpush2.msra.mxu0 0.0
        %340 = vmatprep.subr.mxu0 0.0
        %341 = vmatpush2.msra.mxu0 0.0
        %342 = vmatprep.subr.mxu0 0.0
        %343 = vmatpush2.msra.mxu0 0.0
        %344 = vmatprep.subr.mxu0 0.0
        %345 = vmatpush2.msra.mxu0 0.0
        %346 = vmatprep.subr.mxu0 0.0
        %347 = vmatpush2.msra.mxu0 0.0
        %348 = vmatprep.subr.mxu0 0.0
        %349 = vmatpush2.msra.mxu0 0.0
        %350 = vmatprep.subr.mxu0 0.0
        %351 = vmatpush2.msra.mxu0 0.0
        %352 = vmatprep.subr.mxu0 0.0
        %353 = vmatpush2.msra.mxu0 0.0
        %354 = vmatprep.subr.mxu0 0.0
        %355 = vmatpush2.msra.mxu0 0.0
        %356 = vmatprep.subr.mxu0 0.0
        %357 = vmatpush2.msra.mxu0 0.0
        %358 = vmatprep.subr.mxu0 0.0
        %359 = vmatpush2.msra.mxu0 0.0
        %360 = vmatprep.subr.mxu0 0.0
        %361 = vmatpush2.msra.mxu0 0.0
        %362 = vmatprep.mubr.f32.mxu0 0.0
        %363 = vmatmul.mubr.f32.gmra.mxu0 %v290
        %v364 = vpop.f32.mrf.mxu0
        %v365 = vadd.f32 0.0, %v364
        %v366 = vpop.f32.mrf.mxu0
        %367 = vmatprep.mubr.f32.mxu0 0.0
        %368 = vmatmul.mubr.f32.gmra.mxu0 %v295
        %v369 = vpop.f32.mrf.mxu0
        %v370 = vadd.f32 0.0, %v369
        %v371 = vpop.f32.mrf.mxu0
        %372 = vdwg.mxu0
        %v373 = vmax.f32 %v365, 0.0
        %v374 = vmax.f32 %v370, 0.0
        %375 = vst [vmem:[#allocation2] sm:$0xff] %v373
        %376 = vst [vmem:[#allocation2 + $0x8] sm:$0xff] %v374
        %v377 = vmax.f32 %v373, %v374
        %v378 = vrot.slane %v377, 4
        %v379 = vmax.f32 %v377, %v378
        %v380 = vrot.slane %v379, 2
        %v381 = vmax.f32 %v379, %v380
        %v382 = vrot.slane %v381, 1
        %v383 = vmax.f32 %v381, %v382
        %384 = vst [vmem:[%s177] sm:$0x1] %v383
        %v385 = vld [vmem:[#allocation2] sm:$0xff]
        %v386 = vld [vmem:[#allocation2 + $0x8] sm:$0xff]
        %s387 = scalar_lea.vmem [#allocation8], 128
        %v388 = vld [vmem:[%s387] sm:$0xff]
        %v389 = vld [vmem:[%s387 + $0x8] sm:$0xff]
        %v390 = vld [vmem:[%s387 + $0x10] sm:$0xff]
        %v391 = vld [vmem:[%s387 + $0x18] sm:$0xff]
        %v392 = vld [vmem:[%s387 + $0x20] sm:$0xff]
        %v393 = vld [vmem:[%s387 + $0x28] sm:$0xff]
        %v394 = vld [vmem:[%s387 + $0x30] sm:$0xff]
        %v395 = vld [vmem:[%s387 + $0x38] sm:$0xff]
        %v396 = vld [vmem:[%s387 + $0x40] sm:$0xff]
        %v397 = vld [vmem:[%s387 + $0x48] sm:$0xff]
        %v398 = vld [vmem:[%s387 + $0x50] sm:$0xff]
        %v399 = vld [vmem:[%s387 + $0x58] sm:$0xff]
        %v400 = vld [vmem:[%s387 + $0x60] sm:$0xff]
        %v401 = vld [vmem:[%s387 + $0x68] sm:$0xff]
        %v402 = vld [vmem:[%s387 + $0x70] sm:$0xff]
        %v403 = vld [vmem:[%s387 + $0x78] sm:$0xff]
        %v404 = vld [vmem:[#allocation4] sm:$0xff]
        %v405 = vld [vmem:[#allocation4 + $0x8] sm:$0xff]
        %v407 = vsel %vm216, %v404, 0
        %v410 = vsel %vm216, %v405, 0
        %412 = vmatprep.subr.mxu0 0.0
        %413 = vmatpush1.msra.mxu0 0.0
        %414 = vmatprep.subr.mxu0 0.0
        %415 = vmatpush1.msra.mxu0 0.0
        %416 = vmatprep.subr.mxu0 0.0
        %417 = vmatpush1.msra.mxu0 0.0
        %418 = vmatprep.subr.mxu0 0.0
        %419 = vmatpush1.msra.mxu0 0.0
        %420 = vmatprep.subr.mxu0 0.0
        %421 = vmatpush1.msra.mxu0 0.0
        %422 = vmatprep.subr.mxu0 0.0
        %423 = vmatpush1.msra.mxu0 0.0
        %424 = vmatprep.subr.mxu0 0.0
        %425 = vmatpush1.msra.mxu0 0.0
        %426 = vmatprep.subr.mxu0 0.0
        %427 = vmatpush1.msra.mxu0 0.0
        %428 = vmatprep.subr.mxu0 0.0
        %429 = vmatpush1.msra.mxu0 0.0
        %430 = vmatprep.subr.mxu0 0.0
        %431 = vmatpush1.msra.mxu0 0.0
        %432 = vmatprep.subr.mxu0 0.0
        %433 = vmatpush1.msra.mxu0 0.0
        %434 = vmatprep.subr.mxu0 0.0
        %435 = vmatpush1.msra.mxu0 0.0
        %436 = vmatprep.subr.mxu0 0.0
        %437 = vmatpush1.msra.mxu0 0.0
        %438 = vmatprep.subr.mxu0 0.0
        %439 = vmatpush1.msra.mxu0 0.0
        %440 = vmatprep.subr.mxu0 0.0
        %441 = vmatpush1.msra.mxu0 %v386
        %442 = vmatprep.subr.mxu0 0.0
        %443 = vmatpush1.msra.mxu0 %v385
        %444 = vmatprep.subr.mxu0 0.0
        %445 = vmatpush2.msra.mxu0 0.0
        %446 = vmatprep.subr.mxu0 0.0
        %447 = vmatpush2.msra.mxu0 0.0
        %448 = vmatprep.subr.mxu0 0.0
        %449 = vmatpush2.msra.mxu0 0.0
        %450 = vmatprep.subr.mxu0 0.0
        %451 = vmatpush2.msra.mxu0 0.0
        %452 = vmatprep.subr.mxu0 0.0
        %453 = vmatpush2.msra.mxu0 0.0
        %454 = vmatprep.subr.mxu0 0.0
        %455 = vmatpush2.msra.mxu0 0.0
        %456 = vmatprep.subr.mxu0 0.0
        %457 = vmatpush2.msra.mxu0 0.0
        %458 = vmatprep.subr.mxu0 0.0
        %459 = vmatpush2.msra.mxu0 0.0
        %460 = vmatprep.subr.mxu0 0.0
        %461 = vmatpush2.msra.mxu0 0.0
        %462 = vmatprep.subr.mxu0 0.0
        %463 = vmatpush2.msra.mxu0 0.0
        %464 = vmatprep.subr.mxu0 0.0
        %465 = vmatpush2.msra.mxu0 0.0
        %466 = vmatprep.subr.mxu0 0.0
        %467 = vmatpush2.msra.mxu0 0.0
        %468 = vmatprep.subr.mxu0 0.0
        %469 = vmatpush2.msra.mxu0 0.0
        %470 = vmatprep.subr.mxu0 0.0
        %471 = vmatpush2.msra.mxu0 0.0
        %472 = vmatprep.subr.mxu0 0.0
        %473 = vmatpush2.msra.mxu0 0.0
        %474 = vmatprep.subr.mxu0 0.0
        %475 = vmatpush2.msra.mxu0 0.0
        %476 = vmatprep.mubr.f32.mxu0 0.0
        %477 = vmatmul.mubr.f32.gmra.mxu0 %v407
        %v478 = vpop.f32.mrf.mxu0
        %v479 = vadd.f32 0.0, %v478
        %v480 = vpop.f32.mrf.mxu0
        %481 = vmatprep.mubr.f32.mxu0 0.0
        %482 = vmatmul.mubr.f32.gmra.mxu0 %v410
        %v483 = vpop.f32.mrf.mxu0
        %v484 = vadd.f32 0.0, %v483
        %v485 = vpop.f32.mrf.mxu0
        %486 = vdwg.mxu0
        %487 = vmatprep.subr.mxu0 0.0
        %488 = vmatpush1.msra.mxu0 %v403
        %489 = vmatprep.subr.mxu0 0.0
        %490 = vmatpush1.msra.mxu0 %v402
        %491 = vmatprep.subr.mxu0 0.0
        %492 = vmatpush1.msra.mxu0 %v401
        %493 = vmatprep.subr.mxu0 0.0
        %494 = vmatpush1.msra.mxu0 %v400
        %495 = vmatprep.subr.mxu0 0.0
        %496 = vmatpush1.msra.mxu0 %v399
        %497 = vmatprep.subr.mxu0 0.0
        %498 = vmatpush1.msra.mxu0 %v398
        %499 = vmatprep.subr.mxu0 0.0
        %500 = vmatpush1.msra.mxu0 %v397
        %501 = vmatprep.subr.mxu0 0.0
        %502 = vmatpush1.msra.mxu0 %v396
        %503 = vmatprep.subr.mxu0 0.0
        %504 = vmatpush1.msra.mxu0 %v395
        %505 = vmatprep.subr.mxu0 0.0
        %506 = vmatpush1.msra.mxu0 %v394
        %507 = vmatprep.subr.mxu0 0.0
        %508 = vmatpush1.msra.mxu0 %v393
        %509 = vmatprep.subr.mxu0 0.0
        %510 = vmatpush1.msra.mxu0 %v392
        %511 = vmatprep.subr.mxu0 0.0
        %512 = vmatpush1.msra.mxu0 %v391
        %513 = vmatprep.subr.mxu0 0.0
        %514 = vmatpush1.msra.mxu0 %v390
        %515 = vmatprep.subr.mxu0 0.0
        %516 = vmatpush1.msra.mxu0 %v389
        %517 = vmatprep.subr.mxu0 0.0
        %518 = vmatpush1.msra.mxu0 %v388
        %519 = vmatprep.subr.mxu0 0.0
        %520 = vmatpush2.msra.mxu0 0.0
        %521 = vmatprep.subr.mxu0 0.0
        %522 = vmatpush2.msra.mxu0 0.0
        %523 = vmatprep.subr.mxu0 0.0
        %524 = vmatpush2.msra.mxu0 0.0
        %525 = vmatprep.subr.mxu0 0.0
        %526 = vmatpush2.msra.mxu0 0.0
        %527 = vmatprep.subr.mxu0 0.0
        %528 = vmatpush2.msra.mxu0 0.0
        %529 = vmatprep.subr.mxu0 0.0
        %530 = vmatpush2.msra.mxu0 0.0
        %531 = vmatprep.subr.mxu0 0.0
        %532 = vmatpush2.msra.mxu0 0.0
        %533 = vmatprep.subr.mxu0 0.0
        %534 = vmatpush2.msra.mxu0 0.0
        %535 = vmatprep.subr.mxu0 0.0
        %536 = vmatpush2.msra.mxu0 0.0
        %537 = vmatprep.subr.mxu0 0.0
        %538 = vmatpush2.msra.mxu0 0.0
        %539 = vmatprep.subr.mxu0 0.0
        %540 = vmatpush2.msra.mxu0 0.0
        %541 = vmatprep.subr.mxu0 0.0
        %542 = vmatpush2.msra.mxu0 0.0
        %543 = vmatprep.subr.mxu0 0.0
        %544 = vmatpush2.msra.mxu0 0.0
        %545 = vmatprep.subr.mxu0 0.0
        %546 = vmatpush2.msra.mxu0 0.0
        %547 = vmatprep.subr.mxu0 0.0
        %548 = vmatpush2.msra.mxu0 0.0
        %549 = vmatprep.subr.mxu0 0.0
        %550 = vmatpush2.msra.mxu0 0.0
        %551 = vmatprep.mubr.f32.mxu0 0.0
        %552 = vmatmul.mubr.f32.gmra.mxu0 %v479
        %v553 = vpop.f32.mrf.mxu0
        %v554 = vadd.f32 0.0, %v553
        %v555 = vpop.f32.mrf.mxu0
        %556 = vmatprep.mubr.f32.mxu0 0.0
        %557 = vmatmul.mubr.f32.gmra.mxu0 %v484
        %v558 = vpop.f32.mrf.mxu0
        %v559 = vadd.f32 0.0, %v558
        %v560 = vpop.f32.mrf.mxu0
        %561 = vdwg.mxu0
        %v562 = vmax.f32 %v554, 0.0
        %v563 = vmax.f32 %v559, 0.0
        %564 = vst [vmem:[#allocation3] sm:$0xff] %v562
        %565 = vst [vmem:[#allocation3 + $0x8] sm:$0xff] %v563
        %v566 = vmax.f32 %v562, %v563
        %v567 = vrot.slane %v566, 4
        %v568 = vmax.f32 %v566, %v567
        %v569 = vrot.slane %v568, 2
        %v570 = vmax.f32 %v568, %v569
        %v571 = vrot.slane %v570, 1
        %v572 = vmax.f32 %v570, %v571
        %573 = vst [vmem:[%s177 + $0x1] sm:$0x1] %v572
        %v574 = vld [vmem:[#allocation3] sm:$0xff]
        %v575 = vld [vmem:[#allocation3 + $0x8] sm:$0xff]
        %s576 = scalar_lea.vmem [#allocation8], 256
        %v577 = vld [vmem:[%s576] sm:$0xff]
        %v578 = vld [vmem:[%s576 + $0x8] sm:$0xff]
        %v579 = vld [vmem:[%s576 + $0x10] sm:$0xff]
        %v580 = vld [vmem:[%s576 + $0x18] sm:$0xff]
        %v581 = vld [vmem:[%s576 + $0x20] sm:$0xff]
        %v582 = vld [vmem:[%s576 + $0x28] sm:$0xff]
        %v583 = vld [vmem:[%s576 + $0x30] sm:$0xff]
        %v584 = vld [vmem:[%s576 + $0x38] sm:$0xff]
        %v585 = vld [vmem:[%s576 + $0x40] sm:$0xff]
        %v586 = vld [vmem:[%s576 + $0x48] sm:$0xff]
        %v587 = vld [vmem:[%s576 + $0x50] sm:$0xff]
        %v588 = vld [vmem:[%s576 + $0x58] sm:$0xff]
        %v589 = vld [vmem:[%s576 + $0x60] sm:$0xff]
        %v590 = vld [vmem:[%s576 + $0x68] sm:$0xff]
        %v591 = vld [vmem:[%s576 + $0x70] sm:$0xff]
        %v592 = vld [vmem:[%s576 + $0x78] sm:$0xff]
        %v593 = vld [vmem:[#allocation4] sm:$0xff]
        %v594 = vld [vmem:[#allocation4 + $0x8] sm:$0xff]
        %v596 = vsel %vm216, %v593, 0
        %v599 = vsel %vm216, %v594, 0
        %601 = vmatprep.subr.mxu0 0.0
        %602 = vmatpush1.msra.mxu0 0.0
        %603 = vmatprep.subr.mxu0 0.0
        %604 = vmatpush1.msra.mxu0 0.0
        %605 = vmatprep.subr.mxu0 0.0
        %606 = vmatpush1.msra.mxu0 0.0
        %607 = vmatprep.subr.mxu0 0.0
        %608 = vmatpush1.msra.mxu0 0.0
        %609 = vmatprep.subr.mxu0 0.0
        %610 = vmatpush1.msra.mxu0 0.0
        %611 = vmatprep.subr.mxu0 0.0
        %612 = vmatpush1.msra.mxu0 0.0
        %613 = vmatprep.subr.mxu0 0.0
        %614 = vmatpush1.msra.mxu0 0.0
        %615 = vmatprep.subr.mxu0 0.0
        %616 = vmatpush1.msra.mxu0 0.0
        %617 = vmatprep.subr.mxu0 0.0
        %618 = vmatpush1.msra.mxu0 0.0
        %619 = vmatprep.subr.mxu0 0.0
        %620 = vmatpush1.msra.mxu0 0.0
        %621 = vmatprep.subr.mxu0 0.0
        %622 = vmatpush1.msra.mxu0 0.0
        %623 = vmatprep.subr.mxu0 0.0
        %624 = vmatpush1.msra.mxu0 0.0
        %625 = vmatprep.subr.mxu0 0.0
        %626 = vmatpush1.msra.mxu0 0.0
        %627 = vmatprep.subr.mxu0 0.0
        %628 = vmatpush1.msra.mxu0 0.0
        %629 = vmatprep.subr.mxu0 0.0
        %630 = vmatpush1.msra.mxu0 %v575
        %631 = vmatprep.subr.mxu0 0.0
        %632 = vmatpush1.msra.mxu0 %v574
        %633 = vmatprep.subr.mxu0 0.0
        %634 = vmatpush2.msra.mxu0 0.0
        %635 = vmatprep.subr.mxu0 0.0
        %636 = vmatpush2.msra.mxu0 0.0
        %637 = vmatprep.subr.mxu0 0.0
        %638 = vmatpush2.msra.mxu0 0.0
        %639 = vmatprep.subr.mxu0 0.0
        %640 = vmatpush2.msra.mxu0 0.0
        %641 = vmatprep.subr.mxu0 0.0
        %642 = vmatpush2.msra.mxu0 0.0
        %643 = vmatprep.subr.mxu0 0.0
        %644 = vmatpush2.msra.mxu0 0.0
        %645 = vmatprep.subr.mxu0 0.0
        %646 = vmatpush2.msra.mxu0 0.0
        %647 = vmatprep.subr.mxu0 0.0
        %648 = vmatpush2.msra.mxu0 0.0
        %649 = vmatprep.subr.mxu0 0.0
        %650 = vmatpush2.msra.mxu0 0.0
        %651 = vmatprep.subr.mxu0 0.0
        %652 = vmatpush2.msra.mxu0 0.0
        %653 = vmatprep.subr.mxu0 0.0
        %654 = vmatpush2.msra.mxu0 0.0
        %655 = vmatprep.subr.mxu0 0.0
        %656 = vmatpush2.msra.mxu0 0.0
        %657 = vmatprep.subr.mxu0 0.0
        %658 = vmatpush2.msra.mxu0 0.0
        %659 = vmatprep.subr.mxu0 0.0
        %660 = vmatpush2.msra.mxu0 0.0
        %661 = vmatprep.subr.mxu0 0.0
        %662 = vmatpush2.msra.mxu0 0.0
        %663 = vmatprep.subr.mxu0 0.0
        %664 = vmatpush2.msra.mxu0 0.0
        %665 = vmatprep.mubr.f32.mxu0 0.0
        %666 = vmatmul.mubr.f32.gmra.mxu0 %v596
        %v667 = vpop.f32.mrf.mxu0
        %v668 = vadd.f32 0.0, %v667
        %v669 = vpop.f32.mrf.mxu0
        %670 = vmatprep.mubr.f32.mxu0 0.0
        %671 = vmatmul.mubr.f32.gmra.mxu0 %v599
        %v672 = vpop.f32.mrf.mxu0
        %v673 = vadd.f32 0.0, %v672
        %v674 = vpop.f32.mrf.mxu0
        %675 = vdwg.mxu0
        %676 = vmatprep.subr.mxu0 0.0
        %677 = vmatpush1.msra.mxu0 %v592
        %678 = vmatprep.subr.mxu0 0.0
        %679 = vmatpush1.msra.mxu0 %v591
        %680 = vmatprep.subr.mxu0 0.0
        %681 = vmatpush1.msra.mxu0 %v590
        %682 = vmatprep.subr.mxu0 0.0
        %683 = vmatpush1.msra.mxu0 %v589
        %684 = vmatprep.subr.mxu0 0.0
        %685 = vmatpush1.msra.mxu0 %v588
        %686 = vmatprep.subr.mxu0 0.0
        %687 = vmatpush1.msra.mxu0 %v587
        %688 = vmatprep.subr.mxu0 0.0
        %689 = vmatpush1.msra.mxu0 %v586
        %690 = vmatprep.subr.mxu0 0.0
        %691 = vmatpush1.msra.mxu0 %v585
        %692 = vmatprep.subr.mxu0 0.0
        %693 = vmatpush1.msra.mxu0 %v584
        %694 = vmatprep.subr.mxu0 0.0
        %695 = vmatpush1.msra.mxu0 %v583
        %696 = vmatprep.subr.mxu0 0.0
        %697 = vmatpush1.msra.mxu0 %v582
        %698 = vmatprep.subr.mxu0 0.0
        %699 = vmatpush1.msra.mxu0 %v581
        %700 = vmatprep.subr.mxu0 0.0
        %701 = vmatpush1.msra.mxu0 %v580
        %702 = vmatprep.subr.mxu0 0.0
        %703 = vmatpush1.msra.mxu0 %v579
        %704 = vmatprep.subr.mxu0 0.0
        %705 = vmatpush1.msra.mxu0 %v578
        %706 = vmatprep.subr.mxu0 0.0
        %707 = vmatpush1.msra.mxu0 %v577
        %708 = vmatprep.subr.mxu0 0.0
        %709 = vmatpush2.msra.mxu0 0.0
        %710 = vmatprep.subr.mxu0 0.0
        %711 = vmatpush2.msra.mxu0 0.0
        %712 = vmatprep.subr.mxu0 0.0
        %713 = vmatpush2.msra.mxu0 0.0
        %714 = vmatprep.subr.mxu0 0.0
        %715 = vmatpush2.msra.mxu0 0.0
        %716 = vmatprep.subr.mxu0 0.0
        %717 = vmatpush2.msra.mxu0 0.0
        %718 = vmatprep.subr.mxu0 0.0
        %719 = vmatpush2.msra.mxu0 0.0
        %720 = vmatprep.subr.mxu0 0.0
        %721 = vmatpush2.msra.mxu0 0.0
        %722 = vmatprep.subr.mxu0 0.0
        %723 = vmatpush2.msra.mxu0 0.0
        %724 = vmatprep.subr.mxu0 0.0
        %725 = vmatpush2.msra.mxu0 0.0
        %726 = vmatprep.subr.mxu0 0.0
        %727 = vmatpush2.msra.mxu0 0.0
        %728 = vmatprep.subr.mxu0 0.0
        %729 = vmatpush2.msra.mxu0 0.0
        %730 = vmatprep.subr.mxu0 0.0
        %731 = vmatpush2.msra.mxu0 0.0
        %732 = vmatprep.subr.mxu0 0.0
        %733 = vmatpush2.msra.mxu0 0.0
        %734 = vmatprep.subr.mxu0 0.0
        %735 = vmatpush2.msra.mxu0 0.0
        %736 = vmatprep.subr.mxu0 0.0
        %737 = vmatpush2.msra.mxu0 0.0
        %738 = vmatprep.subr.mxu0 0.0
        %739 = vmatpush2.msra.mxu0 0.0
        %740 = vmatprep.mubr.f32.mxu0 0.0
        %741 = vmatmul.mubr.f32.gmra.mxu0 %v668
        %v742 = vpop.f32.mrf.mxu0
        %v743 = vadd.f32 0.0, %v742
        %v744 = vpop.f32.mrf.mxu0
        %745 = vmatprep.mubr.f32.mxu0 0.0
        %746 = vmatmul.mubr.f32.gmra.mxu0 %v673
        %v747 = vpop.f32.mrf.mxu0
        %v748 = vadd.f32 0.0, %v747
        %v749 = vpop.f32.mrf.mxu0
        %750 = vdwg.mxu0
        %v751 = vmax.f32 %v743, 0.0
        %v752 = vmax.f32 %v748, 0.0
        %v753 = vmax.f32 %v751, %v752
        %v754 = vrot.slane %v753, 4
        %v755 = vmax.f32 %v753, %v754
        %v756 = vrot.slane %v755, 2
        %v757 = vmax.f32 %v755, %v756
        %v758 = vrot.slane %v757, 1
        %v759 = vmax.f32 %v757, %v758
        %760 = vst [vmem:[%s177 + $0x2] sm:$0x1] %v759
        %p761 = scmp.lt.s32.totalorder %s18, 1
        %s762 = scalar_select %p761, %s18, 1
        %s763 = smul.addr %s762, 4
        %s764 = scalar_lea.vmem %s3, %s763
        // Predicated region
        $region41: #{tpu_custom_call.1} parent=27 // pred_check
          %p765 = pneg %p83
        $region42: #{tpu_custom_call.1} parent=27 // pred_check_branch
          %767 = sbr.rel (%p765) target = $region44
        $region43: #{tpu_custom_call.1} parent=27 // pred_region
          _
        $region44: #{tpu_custom_call.1} parent=27 // pred_fallthru
          _
      $region28: #{tpu_custom_call.1} parent=5 // pred_fallthru
        _
      %p768 = scmp.le.s32.totalorder 2, %s13
      // Predicated region
      $region45: #{tpu_custom_call.1} parent=5 // pred_check
        %p769 = pneg %p768
      $region46: #{tpu_custom_call.1} parent=5 // pred_check_branch
        %771 = sbr.rel (%p769) target = $region48
      $region47: #{tpu_custom_call.1} parent=5 // pred_region
        %s772 = ssub.s32 %s13, 2
        // Predicated region
        $region49: #{tpu_custom_call.1} parent=47 // pred_check
          %p773 = pneg %p89
        $region50: #{tpu_custom_call.1} parent=47 // pred_check_branch
          %775 = sbr.rel (%p773) target = $region52
        $region51: #{tpu_custom_call.1} parent=47 // pred_region
          %p776 = scmp.lt.s32.totalorder %s19, 1
          %s777 = scalar_select %p776, %s19, 1
          %s778 = smul.addr %s777, 4
          %s779 = scalar_lea.vmem %s3, %s778
        $region52: #{tpu_custom_call.1} parent=47 // pred_fallthru
          _
      $region48: #{tpu_custom_call.1} parent=5 // pred_fallthru
        _
    $region6: #{tpu_custom_call.1} parent=1 // loop_footer
      %s17 = sadd.s32 1, %s13
    $region7: #{tpu_custom_call.1} parent=1 // loop_footer_branch
      %12 = sbr.rel target = $region3
    $region8: #{tpu_custom_call.1} parent=1 // loop_exit
      _
    %780 = vsyncpa [#allocation7], 1
    %s781 = scalar_lea.sflag [#allocation7], 1
    %782 = vsyncpa %s781, 1
    %783 = vsyncpa [#allocation9], 1
  %784 = vsyncmov [#allocation5]
  %s785 = vpop.sfrf %784
  %p786 = scmp.eq.s32.totalorder %s785, 0
  %p787 = pneg %p786
  %789 = shalt.err (%p787)

// kernel: tpu_custom_call.1
$region0: #{tpu_custom_call.1}
  #allocation0 [shape = 'u32[]', space=smem, size = 0x4, offset = 0x4, fixed_abs, tag = 'smem constant byte address 0x4 - core index']
  #allocation1 [shape = 'u32[144,128]{1,0:T(1,128)}', space=vmem, size = 0x12000, scoped, tag = 'internal scratch']
  #allocation2 [shape = 'f32[1,16,128]{2,1,0:T(8,128)}', space=vmem, size = 0x2000, scoped, tag = 'scratch operand']
  #allocation3 [shape = 'f32[1,16,128]{2,1,0:T(8,128)}', space=vmem, size = 0x2000, scoped, tag = 'scratch operand']
  #allocation4 [shape = 'f32[1,1,16,16]{3,2,1,0:T(8,128)}', space=vmem, size = 0x2000, scoped, tag = 'scratch operand']
  #allocation5 [shape = 's32[1]{0}', space=sflag, size = 0x4, scoped, tag = 'scratch operand']
  #allocation10 [shape = 's32[]', space=sflag, size = 0x4, offset = 0, fixed_abs, tag = 'sflag constant byte address 0x0 - dummy sync flag']
  #allocation11 [shape = 's32[]', space=sflag, size = 0x4, offset = 0, fixed_abs, tag = 'sflag constant byte address 0x0 - dummy sync flag']
  #allocation12 [shape = 'u32[]', space=smem, size = 0x4, offset = 0x44, fixed_abs, tag = 'smem constant byte address 0x44 - assertion arg 0']
  #allocation13 [shape = 'u32[]', space=smem, size = 0x4, offset = 0x48, fixed_abs, tag = 'smem constant byte address 0x48 - assertion arg 1']
  %s0 = inlined_call_operand.hbm [shape: f32[2,16,16], index: 0, kind: input, shape index: {}]
  %s1 = inlined_call_operand.hbm [shape: f32[2,16,128], index: 1, kind: input, shape index: {}]
  %s2 = inlined_call_operand.hbm [shape: f32[3,128,128], index: 2, kind: input, shape index: {}]
  %s3 = inlined_call_operand.vmem [shape: f32[2,3,128], index: 3, kind: output, shape index: {}]
  %s4 = sld [smem:[#allocation0]]
  $region53: #{tpu_custom_call.1} parent=0
    _
  %s6 = ssub.s32 1, %s4
  %s7 = scalar_select 0, %s6, %s4
  $region1: #{tpu_custom_call.1} parent=0
    #allocation6 [shape = 'u8[16384]{0}', space=vmem, size = 0x4000, scoped, tag = 'input window, operand 1']
    #allocation7 [shape = 's32[2]{0}', space=sflag, size = 0x8, scoped, tag = 'scoped memory for tpu_custom_call.1']
    #allocation8 [shape = 'u8[196608]{0}', space=vmem, size = 0x30000, scoped, tag = 'input window, operand 2, single buffered']
    #allocation9 [shape = 's32[1]{0}', space=sflag, size = 0x4, scoped, tag = 'scoped memory for tpu_custom_call.1']
    %8 = vsyncpa [#allocation7], 0
    %s9 = scalar_lea.sflag [#allocation7], 1
    %10 = vsyncpa %s9, 0
    %11 = vsyncpa [#allocation9], 0
    loop: start=0, step=1, limit=4
    $region2: #{tpu_custom_call.1} parent=1 // loop_pre_header
      _
    $region3: #{tpu_custom_call.1} parent=1 // loop_header
      %s13 = sphi 0, %s17
      %p14 = scmp.ge.s32.totalorder %s13, 4
      %s23 = sphi 0, %s25
      %s26 = sphi 0, %s23
      %s27 = sphi 0, %s26
      %s43 = sphi 0, %s27
      %s47 = sphi 0, %s47
      %s49 = sphi 0, %s47
      %s50 = sphi 0, %s49
      %s64 = sphi 0, %s50
      %s70 = sphi 0, %s72
      %s73 = sphi 0, %s70
      %s74 = sphi 0, %s73
      %s90 = sphi 0, %s74
    $region4: #{tpu_custom_call.1} parent=1 // loop_header_branch
      %16 = sbr.rel (%p14) target = $region8
    $region5: #{tpu_custom_call.1} parent=1 // loop_body
      %s18 = ssub.s32 %s13, 1
      %s19 = ssub.s32 %s13, 2
      %s20 = sadd.s32 %s13, 1
      %s21 = ssub.s32 %s13, %s20
      %p22 = scmp.eq.s32.totalorder %s21, 0
      %s24 = sadd.s32 %s23, 1
      %s25 = scalar_select %p22, %s23, %s24
      %p28 = pneg %p22
      %p29 = scmp.eq.s32.totalorder %s13, 1
      %p30 = por %p28, %p29
      %p31 = scmp.ne.s32.totalorder %s23, %s26
      %p32 = scmp.eq.s32.totalorder %s13, 0
      %p33 = por %p31, %p32
      %p34 = scmp.ne.s32.totalorder %s23, %s26
      %p35 = scmp.eq.s32.totalorder %s18, 1
      %p36 = por %p34, %p35
      %p37 = scmp.ne.s32.totalorder %s26, %s27
      %p38 = scmp.eq.s32.totalorder %s18, 0
      %p39 = por %p37, %p38
      %p40 = scmp.ne.s32.totalorder %s26, %s27
      %p41 = scmp.eq.s32.totalorder %s19, 1
      %p42 = por %p40, %p41
      %p44 = scmp.ne.s32.totalorder %s27, %s43
      %p45 = scmp.eq.s32.totalorder %s19, 0
      %p46 = por %p44, %p45
      %s48 = sadd.s32 %s47, 1
      %p51 = scmp.eq.s32.totalorder %s13, 1
      %p52 = scmp.ne.s32.totalorder %s47, %s49
      %p53 = scmp.eq.s32.totalorder %s13, 0
      %p54 = por %p52, %p53
      %p55 = scmp.ne.s32.totalorder %s47, %s49
      %p56 = scmp.eq.s32.totalorder %s18, 1
      %p57 = por %p55, %p56
      %p58 = scmp.ne.s32.totalorder %s49, %s50
      %p59 = scmp.eq.s32.totalorder %s18, 0
      %p60 = por %p58, %p59
      %p61 = scmp.ne.s32.totalorder %s49, %s50
      %p62 = scmp.eq.s32.totalorder %s19, 1
      %p63 = por %p61, %p62
      %p65 = scmp.ne.s32.totalorder %s50, %s64
      %p66 = scmp.eq.s32.totalorder %s19, 0
      %p67 = por %p65, %p66
      %s68 = ssub.s32 %s13, %s20
      %p69 = scmp.eq.s32.totalorder %s68, 0
      %s71 = sadd.s32 %s70, 1
      %s72 = scalar_select %p69, %s70, %s71
      %p75 = pneg %p69
      %p76 = scmp.eq.s32.totalorder %s13, 1
      %p77 = por %p75, %p76
      %p78 = scmp.ne.s32.totalorder %s70, %s73
      %p79 = scmp.eq.s32.totalorder %s13, 0
      %p80 = por %p78, %p79
      %p81 = scmp.ne.s32.totalorder %s70, %s73
      %p82 = scmp.eq.s32.totalorder %s18, 1
      %p83 = por %p81, %p82
      %p84 = scmp.ne.s32.totalorder %s73, %s74
      %p85 = scmp.eq.s32.totalorder %s18, 0
      %p86 = por %p84, %p85
      %p87 = scmp.ne.s32.totalorder %s73, %s74
      %p88 = scmp.eq.s32.totalorder %s19, 1
      %p89 = por %p87, %p88
      %p91 = scmp.ne.s32.totalorder %s74, %s90
      %p92 = scmp.eq.s32.totalorder %s19, 0
      %p93 = por %p91, %p92
      %p94 = scmp.le.s32.totalorder 1, %s13
      %p95 = scmp.lt.s32.totalorder %s13, 3
      %p96 = pnand %p94, %p95
      %p97 = pneg %p96
      // Predicated region
      $region9: #{tpu_custom_call.1} parent=5 // pred_check
        _
      $region10: #{tpu_custom_call.1} parent=5 // pred_check_branch
        %99 = sbr.rel (%p96) target = $region12
      $region11: #{tpu_custom_call.1} parent=5 // pred_region
        %s100 = ssub.s32 %s13, 1
        // Predicated region
        $region13: #{tpu_custom_call.1} parent=11 // pred_check
          %p101 = pneg %p60
        $region14: #{tpu_custom_call.1} parent=11 // pred_check_branch
          %103 = sbr.rel (%p101) target = $region16
        $region15: #{tpu_custom_call.1} parent=11 // pred_region
          %s105 = ssub.s32 6144, 6144
          %106 = vsyncadd [#allocation9], %s105
          %s107 = sshll.u32 [#allocation8], 4
          %s108 = int_to_ptr.vmem [resolvable:$true] %s107
          %113 = dma.hbm_to_vmem [thread:$0]  %s2, 6144, %s108, [#allocation9], 128, 128, 8
        $region16: #{tpu_custom_call.1} parent=11 // pred_fallthru
          _
      $region12: #{tpu_custom_call.1} parent=5 // pred_fallthru
        _
      %p114 = scmp.lt.s32.totalorder %s13, 2
      // Predicated region
      $region17: #{tpu_custom_call.1} parent=5 // pred_check
        %p115 = pneg %p114
      $region18: #{tpu_custom_call.1} parent=5 // pred_check_branch
        %117 = sbr.rel (%p115) target = $region20
      $region19: #{tpu_custom_call.1} parent=5 // pred_region
        // Predicated region
        $region21: #{tpu_custom_call.1} parent=19 // pred_check
          %p118 = pneg %p33
        $region22: #{tpu_custom_call.1} parent=19 // pred_check_branch
          %120 = sbr.rel (%p118) target = $region24
        $region23: #{tpu_custom_call.1} parent=19 // pred_region
          %s121 = sand.u32 %s23, 1
          %s122 = scalar_lea.sflag [#allocation7], %s121
          %s123 = sand.u32 %s23, 1
          %s124 = smul.addr %s123, 16
          %s125 = scalar_lea.vmem [#allocation6], %s124
          %s127 = ssub.s32 256, 256
          %128 = vsyncadd %s122, %s127
          %s129 = smul.addr %s13, 2
          %s130 = smul.addr %s129, 128
          %s131 = scalar_lea.hbm %s1, %s130
          %s132 = sshll.u32 %s125, 4
          %s133 = int_to_ptr.vmem [resolvable:$true] %s132
          %138 = dma.hbm_to_vmem [thread:$0]  %s131, 256, %s133, %s122, 128, 128, 8
        $region24: #{tpu_custom_call.1} parent=19 // pred_fallthru
          _
      $region20: #{tpu_custom_call.1} parent=5 // pred_fallthru
        _
      %p139 = scmp.le.s32.totalorder 1, %s13
      %p140 = scmp.lt.s32.totalorder %s13, 3
      %p141 = pnand %p139, %p140
      %p142 = pneg %p141
      // Predicated region
      $region25: #{tpu_custom_call.1} parent=5 // pred_check
        _
      $region26: #{tpu_custom_call.1} parent=5 // pred_check_branch
        %144 = sbr.rel (%p141) target = $region28
      $region27: #{tpu_custom_call.1} parent=5 // pred_region
        %s145 = ssub.s32 %s13, 1
        %s146 = sand.u32 %s26, 1
        %s147 = scalar_lea.sflag [#allocation7], %s146
        %s148 = sand.u32 %s26, 1
        %s149 = smul.addr %s148, 16
        %s150 = scalar_lea.vmem [#allocation6], %s149
        // Predicated region
        $region29: #{tpu_custom_call.1} parent=27 // pred_check
          %p151 = pneg %p39
        $region30: #{tpu_custom_call.1} parent=27 // pred_check_branch
          %153 = sbr.rel (%p151) target = $region32
        $region31: #{tpu_custom_call.1} parent=27 // pred_region
          %154 = dma.done %s147, 256
        $region32: #{tpu_custom_call.1} parent=27 // pred_fallthru
          _
        // Predicated region
        $region33: #{tpu_custom_call.1} parent=27 // pred_check
          %p155 = pneg %p60
        $region34: #{tpu_custom_call.1} parent=27 // pred_check_branch
          %157 = sbr.rel (%p155) target = $region36
        $region35: #{tpu_custom_call.1} parent=27 // pred_region
          %158 = dma.done [#allocation9], 6144
        $region36: #{tpu_custom_call.1} parent=27 // pred_fallthru
          _
        %s159 = sand.u32 %s26, 1
        %s160 = scalar_lea.sflag [#allocation7], %s159
        %s161 = sand.u32 %s26, 1
        %s162 = smul.addr %s161, 16
        %s163 = scalar_lea.vmem [#allocation6], %s162
        %p164 = pneg %p39
        %p165 = pneg %p36
        %p166 = pneg %p60
        %p167 = pneg %p57
        %p168 = pneg %p86
        %p169 = pneg %p83
        %p170 = scmp.lt.s32.totalorder %s18, 1
        %s171 = scalar_select %p170, %s18, 1
        %s172 = smul.addr %s171, 4
        %s173 = scalar_lea.vmem %s3, %s172
        %p174 = scmp.lt.s32.totalorder %s18, 1
        %s175 = scalar_select %p174, %s18, 1
        %s176 = smul.addr %s175, 4
        %s177 = scalar_lea.vmem %s3, %s176
        %s178 = smul.u32 %s18, 16
        %s179 = smul.addr %s178, 16
        %s180 = scalar_lea.hbm %s0, %s179
        // Predicated region
        $region37: #{tpu_custom_call.1} parent=27 // pred_check
          _
        $region38: #{tpu_custom_call.1} parent=27 // pred_check_branch
          %182 = sbr.rel target = $region40
        $region39: #{tpu_custom_call.1} parent=27 // pred_region
          %183 = sst [smem:[#allocation12]] [#allocation11]
          %184 = sst [smem:[#allocation13]] [#allocation10]
        $region40: #{tpu_custom_call.1} parent=27 // pred_fallthru
          _
        %186 = shalt.err (0)
        %s188 = sshll.u32 [#allocation4], 4
        %s189 = int_to_ptr.vmem [resolvable:$true] %s188
        %191 = dma.hbm_to_vmem [thread:$0]  %s180, 256, %s189, [#allocation5]
        %v192 = vld [vmem:[%s150] sm:$0xff]
        %v193 = vld [vmem:[%s150 + $0x8] sm:$0xff]
        %v194 = vld [vmem:[#allocation8] sm:$0xff]
        %v195 = vld [vmem:[#allocation8 + $0x8] sm:$0xff]
        %v196 = vld [vmem:[#allocation8 + $0x10] sm:$0xff]
        %v197 = vld [vmem:[#allocation8 + $0x18] sm:$0xff]
        %v198 = vld [vmem:[#allocation8 + $0x20] sm:$0xff]
        %v199 = vld [vmem:[#allocation8 + $0x28] sm:$0xff]
        %v200 = vld [vmem:[#allocation8 + $0x30] sm:$0xff]
        %v201 = vld [vmem:[#allocation8 + $0x38] sm:$0xff]
        %v202 = vld [vmem:[#allocation8 + $0x40] sm:$0xff]
        %v203 = vld [vmem:[#allocation8 + $0x48] sm:$0xff]
        %v204 = vld [vmem:[#allocation8 + $0x50] sm:$0xff]
        %v205 = vld [vmem:[#allocation8 + $0x58] sm:$0xff]
        %v206 = vld [vmem:[#allocation8 + $0x60] sm:$0xff]
        %v207 = vld [vmem:[#allocation8 + $0x68] sm:$0xff]
        %v208 = vld [vmem:[#allocation8 + $0x70] sm:$0xff]
        %v209 = vld [vmem:[#allocation8 + $0x78] sm:$0xff]
        %s210 = smul.u32 1, 16
        %s211 = smul.u32 %s210, 1
        %s212 = sshll.u32 %s211, 4
        %213 = dma.done [#allocation5], %s212
        %v214 = vld [vmem:[#allocation4] sm:$0xff]
        %v215 = vld [vmem:[#allocation4 + $0x8] sm:$0xff]
        %vm216 = vcmask 130048
        %v218 = vsel %vm216, %v214, 0
        %v221 = vsel %vm216, %v215, 0
        %223 = vmatprep.subr.mxu0 0.0
        %224 = vmatpush1.msra.mxu0 0.0
        %225 = vmatprep.subr.mxu0 0.0
        %226 = vmatpush1.msra.mxu0 0.0
        %227 = vmatprep.subr.mxu0 0.0
        %228 = vmatpush1.msra.mxu0 0.0
        %229 = vmatprep.subr.mxu0 0.0
        %230 = vmatpush1.msra.mxu0 0.0
        %231 = vmatprep.subr.mxu0 0.0
        %232 = vmatpush1.msra.mxu0 0.0
        %233 = vmatprep.subr.mxu0 0.0
        %234 = vmatpush1.msra.mxu0 0.0
        %235 = vmatprep.subr.mxu0 0.0
        %236 = vmatpush1.msra.mxu0 0.0
        %237 = vmatprep.subr.mxu0 0.0
        %238 = vmatpush1.msra.mxu0 0.0
        %239 = vmatprep.subr.mxu0 0.0
        %240 = vmatpush1.msra.mxu0 0.0
        %241 = vmatprep.subr.mxu0 0.0
        %242 = vmatpush1.msra.mxu0 0.0
        %243 = vmatprep.subr.mxu0 0.0
        %244 = vmatpush1.msra.mxu0 0.0
        %245 = vmatprep.subr.mxu0 0.0
        %246 = vmatpush1.msra.mxu0 0.0
        %247 = vmatprep.subr.mxu0 0.0
        %248 = vmatpush1.msra.mxu0 0.0
        %249 = vmatprep.subr.mxu0 0.0
        %250 = vmatpush1.msra.mxu0 0.0
        %251 = vmatprep.subr.mxu0 0.0
        %252 = vmatpush1.msra.mxu0 %v193
        %253 = vmatprep.subr.mxu0 0.0
        %254 = vmatpush1.msra.mxu0 %v192
        %255 = vmatprep.subr.mxu0 0.0
        %256 = vmatpush2.msra.mxu0 0.0
        %257 = vmatprep.subr.mxu0 0.0
        %258 = vmatpush2.msra.mxu0 0.0
        %259 = vmatprep.subr.mxu0 0.0
        %260 = vmatpush2.msra.mxu0 0.0
        %261 = vmatprep.subr.mxu0 0.0
        %262 = vmatpush2.msra.mxu0 0.0
        %263 = vmatprep.subr.mxu0 0.0
        %264 = vmatpush2.msra.mxu0 0.0
        %265 = vmatprep.subr.mxu0 0.0
        %266 = vmatpush2.msra.mxu0 0.0
        %267 = vmatprep.subr.mxu0 0.0
        %268 = vmatpush2.msra.mxu0 0.0
        %269 = vmatprep.subr.mxu0 0.0
        %270 = vmatpush2.msra.mxu0 0.0
        %271 = vmatprep.subr.mxu0 0.0
        %272 = vmatpush2.msra.mxu0 0.0
        %273 = vmatprep.subr.mxu0 0.0
        %274 = vmatpush2.msra.mxu0 0.0
        %275 = vmatprep.subr.mxu0 0.0
        %276 = vmatpush2.msra.mxu0 0.0
        %277 = vmatprep.subr.mxu0 0.0
        %278 = vmatpush2.msra.mxu0 0.0
        %279 = vmatprep.subr.mxu0 0.0
        %280 = vmatpush2.msra.mxu0 0.0
        %281 = vmatprep.subr.mxu0 0.0
        %282 = vmatpush2.msra.mxu0 0.0
        %283 = vmatprep.subr.mxu0 0.0
        %284 = vmatpush2.msra.mxu0 0.0
        %285 = vmatprep.subr.mxu0 0.0
        %286 = vmatpush2.msra.mxu0 0.0
        %287 = vmatprep.mubr.f32.mxu0 0.0
        %288 = vmatmul.mubr.f32.gmra.mxu0 %v218
        %v289 = vpop.f32.mrf.mxu0
        %v290 = vadd.f32 0.0, %v289
        %v291 = vpop.f32.mrf.mxu0
        %292 = vmatprep.mubr.f32.mxu0 0.0
        %293 = vmatmul.mubr.f32.gmra.mxu0 %v221
        %v294 = vpop.f32.mrf.mxu0
        %v295 = vadd.f32 0.0, %v294
        %v296 = vpop.f32.mrf.mxu0
        %297 = vdwg.mxu0
        %298 = vmatprep.subr.mxu0 0.0
        %299 = vmatpush1.msra.mxu0 %v209
        %300 = vmatprep.subr.mxu0 0.0
        %301 = vmatpush1.msra.mxu0 %v208
        %302 = vmatprep.subr.mxu0 0.0
        %303 = vmatpush1.msra.mxu0 %v207
        %304 = vmatprep.subr.mxu0 0.0
        %305 = vmatpush1.msra.mxu0 %v206
        %306 = vmatprep.subr.mxu0 0.0
        %307 = vmatpush1.msra.mxu0 %v205
        %308 = vmatprep.subr.mxu0 0.0
        %309 = vmatpush1.msra.mxu0 %v204
        %310 = vmatprep.subr.mxu0 0.0
        %311 = vmatpush1.msra.mxu0 %v203
        %312 = vmatprep.subr.mxu0 0.0
        %313 = vmatpush1.msra.mxu0 %v202
        %314 = vmatprep.subr.mxu0 0.0
        %315 = vmatpush1.msra.mxu0 %v201
        %316 = vmatprep.subr.mxu0 0.0
        %317 = vmatpush1.msra.mxu0 %v200
        %318 = vmatprep.subr.mxu0 0.0
        %319 = vmatpush1.msra.mxu0 %v199
        %320 = vmatprep.subr.mxu0 0.0
        %321 = vmatpush1.msra.mxu0 %v198
        %322 = vmatprep.subr.mxu0 0.0
        %323 = vmatpush1.msra.mxu0 %v197
        %324 = vmatprep.subr.mxu0 0.0
        %325 = vmatpush1.msra.mxu0 %v196
        %326 = vmatprep.subr.mxu0 0.0
        %327 = vmatpush1.msra.mxu0 %v195
        %328 = vmatprep.subr.mxu0 0.0
        %329 = vmatpush1.msra.mxu0 %v194
        %330 = vmatprep.subr.mxu0 0.0
        %331 = vmatpush2.msra.mxu0 0.0
        %332 = vmatprep.subr.mxu0 0.0
        %333 = vmatpush2.msra.mxu0 0.0
        %334 = vmatprep.subr.mxu0 0.0
        %335 = vmatpush2.msra.mxu0 0.0
        %336 = vmatprep.subr.mxu0 0.0
        %337 = vmatpush2.msra.mxu0 0.0
        %338 = vmatprep.subr.mxu0 0.0
        %339 = vmatpush2.msra.mxu0 0.0
        %340 = vmatprep.subr.mxu0 0.0
        %341 = vmatpush2.msra.mxu0 0.0
        %342 = vmatprep.subr.mxu0 0.0
        %343 = vmatpush2.msra.mxu0 0.0
        %344 = vmatprep.subr.mxu0 0.0
        %345 = vmatpush2.msra.mxu0 0.0
        %346 = vmatprep.subr.mxu0 0.0
        %347 = vmatpush2.msra.mxu0 0.0
        %348 = vmatprep.subr.mxu0 0.0
        %349 = vmatpush2.msra.mxu0 0.0
        %350 = vmatprep.subr.mxu0 0.0
        %351 = vmatpush2.msra.mxu0 0.0
        %352 = vmatprep.subr.mxu0 0.0
        %353 = vmatpush2.msra.mxu0 0.0
        %354 = vmatprep.subr.mxu0 0.0
        %355 = vmatpush2.msra.mxu0 0.0
        %356 = vmatprep.subr.mxu0 0.0
        %357 = vmatpush2.msra.mxu0 0.0
        %358 = vmatprep.subr.mxu0 0.0
        %359 = vmatpush2.msra.mxu0 0.0
        %360 = vmatprep.subr.mxu0 0.0
        %361 = vmatpush2.msra.mxu0 0.0
        %362 = vmatprep.mubr.f32.mxu0 0.0
        %363 = vmatmul.mubr.f32.gmra.mxu0 %v290
        %v364 = vpop.f32.mrf.mxu0
        %v365 = vadd.f32 0.0, %v364
        %v366 = vpop.f32.mrf.mxu0
        %367 = vmatprep.mubr.f32.mxu0 0.0
        %368 = vmatmul.mubr.f32.gmra.mxu0 %v295
        %v369 = vpop.f32.mrf.mxu0
        %v370 = vadd.f32 0.0, %v369
        %v371 = vpop.f32.mrf.mxu0
        %372 = vdwg.mxu0
        %v373 = vmax.f32 %v365, 0.0
        %v374 = vmax.f32 %v370, 0.0
        %375 = vst [vmem:[#allocation2] sm:$0xff] %v373
        %376 = vst [vmem:[#allocation2 + $0x8] sm:$0xff] %v374
        %v377 = vmax.f32 %v373, %v374
        %v378 = vrot.slane %v377, 4
        %v379 = vmax.f32 %v377, %v378
        %v380 = vrot.slane %v379, 2
        %v381 = vmax.f32 %v379, %v380
        %v382 = vrot.slane %v381, 1
        %v383 = vmax.f32 %v381, %v382
        %384 = vst [vmem:[%s177] sm:$0x1] %v383
        %v385 = vld [vmem:[#allocation2] sm:$0xff]
        %v386 = vld [vmem:[#allocation2 + $0x8] sm:$0xff]
        %s387 = scalar_lea.vmem [#allocation8], 128
        %v388 = vld [vmem:[%s387] sm:$0xff]
        %v389 = vld [vmem:[%s387 + $0x8] sm:$0xff]
        %v390 = vld [vmem:[%s387 + $0x10] sm:$0xff]
        %v391 = vld [vmem:[%s387 + $0x18] sm:$0xff]
        %v392 = vld [vmem:[%s387 + $0x20] sm:$0xff]
        %v393 = vld [vmem:[%s387 + $0x28] sm:$0xff]
        %v394 = vld [vmem:[%s387 + $0x30] sm:$0xff]
        %v395 = vld [vmem:[%s387 + $0x38] sm:$0xff]
        %v396 = vld [vmem:[%s387 + $0x40] sm:$0xff]
        %v397 = vld [vmem:[%s387 + $0x48] sm:$0xff]
        %v398 = vld [vmem:[%s387 + $0x50] sm:$0xff]
        %v399 = vld [vmem:[%s387 + $0x58] sm:$0xff]
        %v400 = vld [vmem:[%s387 + $0x60] sm:$0xff]
        %v401 = vld [vmem:[%s387 + $0x68] sm:$0xff]
        %v402 = vld [vmem:[%s387 + $0x70] sm:$0xff]
        %v403 = vld [vmem:[%s387 + $0x78] sm:$0xff]
        %v404 = vld [vmem:[#allocation4] sm:$0xff]
        %v405 = vld [vmem:[#allocation4 + $0x8] sm:$0xff]
        %v407 = vsel %vm216, %v404, 0
        %v410 = vsel %vm216, %v405, 0
        %412 = vmatprep.subr.mxu0 0.0
        %413 = vmatpush1.msra.mxu0 0.0
        %414 = vmatprep.subr.mxu0 0.0
        %415 = vmatpush1.msra.mxu0 0.0
        %416 = vmatprep.subr.mxu0 0.0
        %417 = vmatpush1.msra.mxu0 0.0
        %418 = vmatprep.subr.mxu0 0.0
        %419 = vmatpush1.msra.mxu0 0.0
        %420 = vmatprep.subr.mxu0 0.0
        %421 = vmatpush1.msra.mxu0 0.0
        %422 = vmatprep.subr.mxu0 0.0
        %423 = vmatpush1.msra.mxu0 0.0
        %424 = vmatprep.subr.mxu0 0.0
        %425 = vmatpush1.msra.mxu0 0.0
        %426 = vmatprep.subr.mxu0 0.0
        %427 = vmatpush1.msra.mxu0 0.0
        %428 = vmatprep.subr.mxu0 0.0
        %429 = vmatpush1.msra.mxu0 0.0
        %430 = vmatprep.subr.mxu0 0.0
        %431 = vmatpush1.msra.mxu0 0.0
        %432 = vmatprep.subr.mxu0 0.0
        %433 = vmatpush1.msra.mxu0 0.0
        %434 = vmatprep.subr.mxu0 0.0
        %435 = vmatpush1.msra.mxu0 0.0
        %436 = vmatprep.subr.mxu0 0.0
        %437 = vmatpush1.msra.mxu0 0.0
        %438 = vmatprep.subr.mxu0 0.0
        %439 = vmatpush1.msra.mxu0 0.0
        %440 = vmatprep.subr.mxu0 0.0
        %441 = vmatpush1.msra.mxu0 %v386
        %442 = vmatprep.subr.mxu0 0.0
        %443 = vmatpush1.msra.mxu0 %v385
        %444 = vmatprep.subr.mxu0 0.0
        %445 = vmatpush2.msra.mxu0 0.0
        %446 = vmatprep.subr.mxu0 0.0
        %447 = vmatpush2.msra.mxu0 0.0
        %448 = vmatprep.subr.mxu0 0.0
        %449 = vmatpush2.msra.mxu0 0.0
        %450 = vmatprep.subr.mxu0 0.0
        %451 = vmatpush2.msra.mxu0 0.0
        %452 = vmatprep.subr.mxu0 0.0
        %453 = vmatpush2.msra.mxu0 0.0
        %454 = vmatprep.subr.mxu0 0.0
        %455 = vmatpush2.msra.mxu0 0.0
        %456 = vmatprep.subr.mxu0 0.0
        %457 = vmatpush2.msra.mxu0 0.0
        %458 = vmatprep.subr.mxu0 0.0
        %459 = vmatpush2.msra.mxu0 0.0
        %460 = vmatprep.subr.mxu0 0.0
        %461 = vmatpush2.msra.mxu0 0.0
        %462 = vmatprep.subr.mxu0 0.0
        %463 = vmatpush2.msra.mxu0 0.0
        %464 = vmatprep.subr.mxu0 0.0
        %465 = vmatpush2.msra.mxu0 0.0
        %466 = vmatprep.subr.mxu0 0.0
        %467 = vmatpush2.msra.mxu0 0.0
        %468 = vmatprep.subr.mxu0 0.0
        %469 = vmatpush2.msra.mxu0 0.0
        %470 = vmatprep.subr.mxu0 0.0
        %471 = vmatpush2.msra.mxu0 0.0
        %472 = vmatprep.subr.mxu0 0.0
        %473 = vmatpush2.msra.mxu0 0.0
        %474 = vmatprep.subr.mxu0 0.0
        %475 = vmatpush2.msra.mxu0 0.0
        %476 = vmatprep.mubr.f32.mxu0 0.0
        %477 = vmatmul.mubr.f32.gmra.mxu0 %v407
        %v478 = vpop.f32.mrf.mxu0
        %v479 = vadd.f32 0.0, %v478
        %v480 = vpop.f32.mrf.mxu0
        %481 = vmatprep.mubr.f32.mxu0 0.0
        %482 = vmatmul.mubr.f32.gmra.mxu0 %v410
        %v483 = vpop.f32.mrf.mxu0
        %v484 = vadd.f32 0.0, %v483
        %v485 = vpop.f32.mrf.mxu0
        %486 = vdwg.mxu0
        %487 = vmatprep.subr.mxu0 0.0
        %488 = vmatpush1.msra.mxu0 %v403
        %489 = vmatprep.subr.mxu0 0.0
        %490 = vmatpush1.msra.mxu0 %v402
        %491 = vmatprep.subr.mxu0 0.0
        %492 = vmatpush1.msra.mxu0 %v401
        %493 = vmatprep.subr.mxu0 0.0
        %494 = vmatpush1.msra.mxu0 %v400
        %495 = vmatprep.subr.mxu0 0.0
        %496 = vmatpush1.msra.mxu0 %v399
        %497 = vmatprep.subr.mxu0 0.0
        %498 = vmatpush1.msra.mxu0 %v398
        %499 = vmatprep.subr.mxu0 0.0
        %500 = vmatpush1.msra.mxu0 %v397
        %501 = vmatprep.subr.mxu0 0.0
        %502 = vmatpush1.msra.mxu0 %v396
        %503 = vmatprep.subr.mxu0 0.0
        %504 = vmatpush1.msra.mxu0 %v395
        %505 = vmatprep.subr.mxu0 0.0
        %506 = vmatpush1.msra.mxu0 %v394
        %507 = vmatprep.subr.mxu0 0.0
        %508 = vmatpush1.msra.mxu0 %v393
        %509 = vmatprep.subr.mxu0 0.0
        %510 = vmatpush1.msra.mxu0 %v392
        %511 = vmatprep.subr.mxu0 0.0
        %512 = vmatpush1.msra.mxu0 %v391
        %513 = vmatprep.subr.mxu0 0.0
        %514 = vmatpush1.msra.mxu0 %v390
        %515 = vmatprep.subr.mxu0 0.0
        %516 = vmatpush1.msra.mxu0 %v389
        %517 = vmatprep.subr.mxu0 0.0
        %518 = vmatpush1.msra.mxu0 %v388
        %519 = vmatprep.subr.mxu0 0.0
        %520 = vmatpush2.msra.mxu0 0.0
        %521 = vmatprep.subr.mxu0 0.0
        %522 = vmatpush2.msra.mxu0 0.0
        %523 = vmatprep.subr.mxu0 0.0
        %524 = vmatpush2.msra.mxu0 0.0
        %525 = vmatprep.subr.mxu0 0.0
        %526 = vmatpush2.msra.mxu0 0.0
        %527 = vmatprep.subr.mxu0 0.0
        %528 = vmatpush2.msra.mxu0 0.0
        %529 = vmatprep.subr.mxu0 0.0
        %530 = vmatpush2.msra.mxu0 0.0
        %531 = vmatprep.subr.mxu0 0.0
        %532 = vmatpush2.msra.mxu0 0.0
        %533 = vmatprep.subr.mxu0 0.0
        %534 = vmatpush2.msra.mxu0 0.0
        %535 = vmatprep.subr.mxu0 0.0
        %536 = vmatpush2.msra.mxu0 0.0
        %537 = vmatprep.subr.mxu0 0.0
        %538 = vmatpush2.msra.mxu0 0.0
        %539 = vmatprep.subr.mxu0 0.0
        %540 = vmatpush2.msra.mxu0 0.0
        %541 = vmatprep.subr.mxu0 0.0
        %542 = vmatpush2.msra.mxu0 0.0
        %543 = vmatprep.subr.mxu0 0.0
        %544 = vmatpush2.msra.mxu0 0.0
        %545 = vmatprep.subr.mxu0 0.0
        %546 = vmatpush2.msra.mxu0 0.0
        %547 = vmatprep.subr.mxu0 0.0
        %548 = vmatpush2.msra.mxu0 0.0
        %549 = vmatprep.subr.mxu0 0.0
        %550 = vmatpush2.msra.mxu0 0.0
        %551 = vmatprep.mubr.f32.mxu0 0.0
        %552 = vmatmul.mubr.f32.gmra.mxu0 %v479
        %v553 = vpop.f32.mrf.mxu0
        %v554 = vadd.f32 0.0, %v553
        %v555 = vpop.f32.mrf.mxu0
        %556 = vmatprep.mubr.f32.mxu0 0.0
        %557 = vmatmul.mubr.f32.gmra.mxu0 %v484
        %v558 = vpop.f32.mrf.mxu0
        %v559 = vadd.f32 0.0, %v558
        %v560 = vpop.f32.mrf.mxu0
        %561 = vdwg.mxu0
        %v562 = vmax.f32 %v554, 0.0
        %v563 = vmax.f32 %v559, 0.0
        %564 = vst [vmem:[#allocation3] sm:$0xff] %v562
        %565 = vst [vmem:[#allocation3 + $0x8] sm:$0xff] %v563
        %v566 = vmax.f32 %v562, %v563
        %v567 = vrot.slane %v566, 4
        %v568 = vmax.f32 %v566, %v567
        %v569 = vrot.slane %v568, 2
        %v570 = vmax.f32 %v568, %v569
        %v571 = vrot.slane %v570, 1
        %v572 = vmax.f32 %v570, %v571
        %573 = vst [vmem:[%s177 + $0x1] sm:$0x1] %v572
        %v574 = vld [vmem:[#allocation3] sm:$0xff]
        %v575 = vld [vmem:[#allocation3 + $0x8] sm:$0xff]
        %s576 = scalar_lea.vmem [#allocation8], 256
        %v577 = vld [vmem:[%s576] sm:$0xff]
        %v578 = vld [vmem:[%s576 + $0x8] sm:$0xff]
        %v579 = vld [vmem:[%s576 + $0x10] sm:$0xff]
        %v580 = vld [vmem:[%s576 + $0x18] sm:$0xff]
        %v581 = vld [vmem:[%s576 + $0x20] sm:$0xff]
        %v582 = vld [vmem:[%s576 + $0x28] sm:$0xff]
        %v583 = vld [vmem:[%s576 + $0x30] sm:$0xff]
        %v584 = vld [vmem:[%s576 + $0x38] sm:$0xff]
        %v585 = vld [vmem:[%s576 + $0x40] sm:$0xff]
        %v586 = vld [vmem:[%s576 + $0x48] sm:$0xff]
        %v587 = vld [vmem:[%s576 + $0x50] sm:$0xff]
        %v588 = vld [vmem:[%s576 + $0x58] sm:$0xff]
        %v589 = vld [vmem:[%s576 + $0x60] sm:$0xff]
        %v590 = vld [vmem:[%s576 + $0x68] sm:$0xff]
        %v591 = vld [vmem:[%s576 + $0x70] sm:$0xff]
        %v592 = vld [vmem:[%s576 + $0x78] sm:$0xff]
        %v593 = vld [vmem:[#allocation4] sm:$0xff]
        %v594 = vld [vmem:[#allocation4 + $0x8] sm:$0xff]
        %v596 = vsel %vm216, %v593, 0
        %v599 = vsel %vm216, %v594, 0
        %601 = vmatprep.subr.mxu0 0.0
        %602 = vmatpush1.msra.mxu0 0.0
        %603 = vmatprep.subr.mxu0 0.0
        %604 = vmatpush1.msra.mxu0 0.0
        %605 = vmatprep.subr.mxu0 0.0
        %606 = vmatpush1.msra.mxu0 0.0
        %607 = vmatprep.subr.mxu0 0.0
        %608 = vmatpush1.msra.mxu0 0.0
        %609 = vmatprep.subr.mxu0 0.0
        %610 = vmatpush1.msra.mxu0 0.0
        %611 = vmatprep.subr.mxu0 0.0
        %612 = vmatpush1.msra.mxu0 0.0
        %613 = vmatprep.subr.mxu0 0.0
        %614 = vmatpush1.msra.mxu0 0.0
        %615 = vmatprep.subr.mxu0 0.0
        %616 = vmatpush1.msra.mxu0 0.0
        %617 = vmatprep.subr.mxu0 0.0
        %618 = vmatpush1.msra.mxu0 0.0
        %619 = vmatprep.subr.mxu0 0.0
        %620 = vmatpush1.msra.mxu0 0.0
        %621 = vmatprep.subr.mxu0 0.0
        %622 = vmatpush1.msra.mxu0 0.0
        %623 = vmatprep.subr.mxu0 0.0
        %624 = vmatpush1.msra.mxu0 0.0
        %625 = vmatprep.subr.mxu0 0.0
        %626 = vmatpush1.msra.mxu0 0.0
        %627 = vmatprep.subr.mxu0 0.0
        %628 = vmatpush1.msra.mxu0 0.0
        %629 = vmatprep.subr.mxu0 0.0
        %630 = vmatpush1.msra.mxu0 %v575
        %631 = vmatprep.subr.mxu0 0.0
        %632 = vmatpush1.msra.mxu0 %v574
        %633 = vmatprep.subr.mxu0 0.0
        %634 = vmatpush2.msra.mxu0 0.0
        %635 = vmatprep.subr.mxu0 0.0
        %636 = vmatpush2.msra.mxu0 0.0
        %637 = vmatprep.subr.mxu0 0.0
        %638 = vmatpush2.msra.mxu0 0.0
        %639 = vmatprep.subr.mxu0 0.0
        %640 = vmatpush2.msra.mxu0 0.0
        %641 = vmatprep.subr.mxu0 0.0
        %642 = vmatpush2.msra.mxu0 0.0
        %643 = vmatprep.subr.mxu0 0.0
        %644 = vmatpush2.msra.mxu0 0.0
        %645 = vmatprep.subr.mxu0 0.0
        %646 = vmatpush2.msra.mxu0 0.0
        %647 = vmatprep.subr.mxu0 0.0
        %648 = vmatpush2.msra.mxu0 0.0
        %649 = vmatprep.subr.mxu0 0.0
        %650 = vmatpush2.msra.mxu0 0.0
        %651 = vmatprep.subr.mxu0 0.0
        %652 = vmatpush2.msra.mxu0 0.0
        %653 = vmatprep.subr.mxu0 0.0
        %654 = vmatpush2.msra.mxu0 0.0
        %655 = vmatprep.subr.mxu0 0.0
        %656 = vmatpush2.msra.mxu0 0.0
        %657 = vmatprep.subr.mxu0 0.0
        %658 = vmatpush2.msra.mxu0 0.0
        %659 = vmatprep.subr.mxu0 0.0
        %660 = vmatpush2.msra.mxu0 0.0
        %661 = vmatprep.subr.mxu0 0.0
        %662 = vmatpush2.msra.mxu0 0.0
        %663 = vmatprep.subr.mxu0 0.0
        %664 = vmatpush2.msra.mxu0 0.0
        %665 = vmatprep.mubr.f32.mxu0 0.0
        %666 = vmatmul.mubr.f32.gmra.mxu0 %v596
        %v667 = vpop.f32.mrf.mxu0
        %v668 = vadd.f32 0.0, %v667
        %v669 = vpop.f32.mrf.mxu0
        %670 = vmatprep.mubr.f32.mxu0 0.0
        %671 = vmatmul.mubr.f32.gmra.mxu0 %v599
        %v672 = vpop.f32.mrf.mxu0
        %v673 = vadd.f32 0.0, %v672
        %v674 = vpop.f32.mrf.mxu0
        %675 = vdwg.mxu0
        %676 = vmatprep.subr.mxu0 0.0
        %677 = vmatpush1.msra.mxu0 %v592
        %678 = vmatprep.subr.mxu0 0.0
        %679 = vmatpush1.msra.mxu0 %v591
        %680 = vmatprep.subr.mxu0 0.0
        %681 = vmatpush1.msra.mxu0 %v590
        %682 = vmatprep.subr.mxu0 0.0
        %683 = vmatpush1.msra.mxu0 %v589
        %684 = vmatprep.subr.mxu0 0.0
        %685 = vmatpush1.msra.mxu0 %v588
        %686 = vmatprep.subr.mxu0 0.0
        %687 = vmatpush1.msra.mxu0 %v587
        %688 = vmatprep.subr.mxu0 0.0
        %689 = vmatpush1.msra.mxu0 %v586
        %690 = vmatprep.subr.mxu0 0.0
        %691 = vmatpush1.msra.mxu0 %v585
        %692 = vmatprep.subr.mxu0 0.0
        %693 = vmatpush1.msra.mxu0 %v584
        %694 = vmatprep.subr.mxu0 0.0
        %695 = vmatpush1.msra.mxu0 %v583
        %696 = vmatprep.subr.mxu0 0.0
        %697 = vmatpush1.msra.mxu0 %v582
        %698 = vmatprep.subr.mxu0 0.0
        %699 = vmatpush1.msra.mxu0 %v581
        %700 = vmatprep.subr.mxu0 0.0
        %701 = vmatpush1.msra.mxu0 %v580
        %702 = vmatprep.subr.mxu0 0.0
        %703 = vmatpush1.msra.mxu0 %v579
        %704 = vmatprep.subr.mxu0 0.0
        %705 = vmatpush1.msra.mxu0 %v578
        %706 = vmatprep.subr.mxu0 0.0
        %707 = vmatpush1.msra.mxu0 %v577
        %708 = vmatprep.subr.mxu0 0.0
        %709 = vmatpush2.msra.mxu0 0.0
        %710 = vmatprep.subr.mxu0 0.0
        %711 = vmatpush2.msra.mxu0 0.0
        %712 = vmatprep.subr.mxu0 0.0
        %713 = vmatpush2.msra.mxu0 0.0
        %714 = vmatprep.subr.mxu0 0.0
        %715 = vmatpush2.msra.mxu0 0.0
        %716 = vmatprep.subr.mxu0 0.0
        %717 = vmatpush2.msra.mxu0 0.0
        %718 = vmatprep.subr.mxu0 0.0
        %719 = vmatpush2.msra.mxu0 0.0
        %720 = vmatprep.subr.mxu0 0.0
        %721 = vmatpush2.msra.mxu0 0.0
        %722 = vmatprep.subr.mxu0 0.0
        %723 = vmatpush2.msra.mxu0 0.0
        %724 = vmatprep.subr.mxu0 0.0
        %725 = vmatpush2.msra.mxu0 0.0
        %726 = vmatprep.subr.mxu0 0.0
        %727 = vmatpush2.msra.mxu0 0.0
        %728 = vmatprep.subr.mxu0 0.0
        %729 = vmatpush2.msra.mxu0 0.0
        %730 = vmatprep.subr.mxu0 0.0
        %731 = vmatpush2.msra.mxu0 0.0
        %732 = vmatprep.subr.mxu0 0.0
        %733 = vmatpush2.msra.mxu0 0.0
        %734 = vmatprep.subr.mxu0 0.0
        %735 = vmatpush2.msra.mxu0 0.0
        %736 = vmatprep.subr.mxu0 0.0
        %737 = vmatpush2.msra.mxu0 0.0
        %738 = vmatprep.subr.mxu0 0.0
        %739 = vmatpush2.msra.mxu0 0.0
        %740 = vmatprep.mubr.f32.mxu0 0.0
        %741 = vmatmul.mubr.f32.gmra.mxu0 %v668
        %v742 = vpop.f32.mrf.mxu0
        %v743 = vadd.f32 0.0, %v742
        %v744 = vpop.f32.mrf.mxu0
        %745 = vmatprep.mubr.f32.mxu0 0.0
        %746 = vmatmul.mubr.f32.gmra.mxu0 %v673
        %v747 = vpop.f32.mrf.mxu0
        %v748 = vadd.f32 0.0, %v747
        %v749 = vpop.f32.mrf.mxu0
        %750 = vdwg.mxu0
        %v751 = vmax.f32 %v743, 0.0
        %v752 = vmax.f32 %v748, 0.0
        %v753 = vmax.f32 %v751, %v752
        %v754 = vrot.slane %v753, 4
        %v755 = vmax.f32 %v753, %v754
        %v756 = vrot.slane %v755, 2
        %v757 = vmax.f32 %v755, %v756
        %v758 = vrot.slane %v757, 1
        %v759 = vmax.f32 %v757, %v758
        %760 = vst [vmem:[%s177 + $0x2] sm:$0x1] %v759
        %p761 = scmp.lt.s32.totalorder %s18, 1
        %s762 = scalar_select %p761, %s18, 1
        %s763 = smul.addr %s762, 4
        %s764 = scalar_lea.vmem %s3, %s763
        // Predicated region
        $region41: #{tpu_custom_call.1} parent=27 // pred_check
          %p765 = pneg %p83
        $region42: #{tpu_custom_call.1} parent=27 // pred_check_branch
          %767 = sbr.rel (%p765) target = $region44
        $region43: #{tpu_custom_call.1} parent=27 // pred_region
          _
        $region44: #{tpu_custom_call.1} parent=27 // pred_fallthru
          _
      $region28: #{tpu_custom_call.1} parent=5 // pred_fallthru
        _
      %p768 = scmp.le.s32.totalorder 2, %s13
      // Predicated region
      $region45: #{tpu_custom_call.1} parent=5 // pred_check
        %p769 = pneg %p768
      $region46: #{tpu_custom_call.1} parent=5 // pred_check_branch
        %771 = sbr.rel (%p769) target = $region48
      $region47: #{tpu_custom_call.1} parent=5 // pred_region
        %s772 = ssub.s32 %s13, 2
        // Predicated region
        $region49: #{tpu_custom_call.1} parent=47 // pred_check
          %p773 = pneg %p89
        $region50: #{tpu_custom_call.1} parent=47 // pred_check_branch
          %775 = sbr.rel (%p773) target = $region52
        $region51: #{tpu_custom_call.1} parent=47 // pred_region
          %p776 = scmp.lt.s32.totalorder %s19, 1
          %s777 = scalar_select %p776, %s19, 1
          %s778 = smul.addr %s777, 4
          %s779 = scalar_lea.vmem %s3, %s778
        $region52: #{tpu_custom_call.1} parent=47 // pred_fallthru
          _
      $region48: #{tpu_custom_call.1} parent=5 // pred_fallthru
        _
    $region6: #{tpu_custom_call.1} parent=1 // loop_footer
      %s17 = sadd.s32 1, %s13
    $region7: #{tpu_custom_call.1} parent=1 // loop_footer_branch
      %12 = sbr.rel target = $region3
    $region8: #{tpu_custom_call.1} parent=1 // loop_exit
      _
    %780 = vsyncpa [#allocation7], 1
    %s781 = scalar_lea.sflag [#allocation7], 1
    %782 = vsyncpa %s781, 1
    %783 = vsyncpa [#allocation9], 1
  %784 = vsyncmov [#allocation5]
  %s785 = vpop.sfrf %784
  %p786 = scmp.eq.s32.totalorder %s785, 0
  %p787 = pneg %p786
  %789 = shalt.err (%p787)

</llo_original>
